<compile_context>
chip_gen: v7x
topology: tpu7x:2x2x1
jax: 0.10.0
libtpu: 0.0.40
codegen_flags: <defaults>
</compile_context>

<pallas_src>
import functools

import jax
import jax.numpy as jnp
from jax.experimental import pallas as pl
from jax.experimental.pallas import tpu as pltpu

LANE = 128
BF16_SUBLANE = 16  # bf16 packs 16 rows per vreg


def _round_up(n: int, m: int) -> int:
    return ((n + m - 1) // m) * m


def _cdiv(a: int, b: int) -> int:
    return (a + b - 1) // b


def mnist_mlp_kernel(x_ref, w1_ref, b1_ref, w2_ref, b2_ref, w3_ref, b3_ref, o_ref):
    # x tile arrives as f32 straight from HBM; cast to bf16 in-kernel (saves a full
    # wrapper-side read+write pass over the activations).
    x = x_ref[...].astype(jnp.bfloat16)

    # Layer 1: Linear(784 -> 512) + ReLU (MXU matmul, f32 accumulation).
    h1 = jnp.dot(x, w1_ref[...], preferred_element_type=jnp.float32) + b1_ref[...]
    h1 = jnp.maximum(h1, 0.0).astype(jnp.bfloat16)

    # Layer 2: Linear(512 -> 512) + ReLU.
    h2 = jnp.dot(h1, w2_ref[...], preferred_element_type=jnp.float32) + b2_ref[...]
    h2 = jnp.maximum(h2, 0.0).astype(jnp.bfloat16)

    # Layer 3: Linear(512 -> 128 padded) -> logits (lane-dense (TB, 128) bf16 store).
    logits = jnp.dot(h2, w3_ref[...], preferred_element_type=jnp.float32) + b3_ref[...]
    o_ref[...] = logits.astype(o_ref.dtype)


@functools.partial(jax.jit, static_argnames=("tb",))
def mnist_forward(x_nchw, params, *, tb=256):
    """x_nchw: (B, 1, 28, 28) float32 (PyTorch NCHW). Returns logits (B, 10) float32.

    tb: max batch tile (sweep 256-512 on v6e/v7x; keep 256 on v5e)."""
    w1, b1, w2, b2, w3, b3 = params
    B = x_nchw.shape[0]
    K1, H = w1.shape          # 784, 512
    N = w3.shape[1]           # 10
    NP = _round_up(N, LANE)   # 10 -> 128 (lane-dense output)

    # Batch tile: multiple of 16 (bf16 sublane packing), <= tb, and capped at ~B/2 so the
    # grid has >= 2 steps when B allows it (v7x: both TensorCores get work).
    TB = min(_round_up(tb, BF16_SUBLANE), _round_up(B, BF16_SUBLANE))
    TB = max(BF16_SUBLANE, min(TB, _round_up(_cdiv(B, 2), BF16_SUBLANE)))

    # nn.Flatten(): (B, 1, 28, 28) -> (B, 784). Pure reshape -- no pad / cast pass over HBM.
    x = x_nchw.reshape(B, K1)

    # bf16 weights (f32 biases). Only layer-3 N needs zero-padding; padding is inert.
    w1p = w1.astype(jnp.bfloat16)                                   # (784, 512)
    w2p = w2.astype(jnp.bfloat16)                                   # (512, 512)
    w3p = jnp.pad(w3.astype(jnp.bfloat16), ((0, 0), (0, NP - N)))   # (512, 128)
    b1p = b1.astype(jnp.float32)
    b2p = b2.astype(jnp.float32)
    b3p = jnp.pad(b3.astype(jnp.float32), ((0, 0), (0, NP - N)))

    const = lambda i: (0, 0)  # weights/biases: same block every step -> resident in VMEM
    # TODO(synk): on v7x, pipeline_mode=pl.Buffered(1) on the weight specs would shave the
    # duplicate ~1.5 MiB weight buffer; skipped here as a minor, riskier tweak.

    out = pl.pallas_call(
        mnist_mlp_kernel,
        out_shape=jax.ShapeDtypeStruct((B, NP), jnp.bfloat16),
        grid=(_cdiv(B, TB),),
        in_specs=[
            pl.BlockSpec((TB, K1), lambda i: (i, 0)),   # x: tiled over batch (partial last block ok)
            pl.BlockSpec((K1, H), const),               # w1
            pl.BlockSpec((1, H), const),                # b1
            pl.BlockSpec((H, H), const),                # w2
            pl.BlockSpec((1, H), const),                # b2
            pl.BlockSpec((H, NP), const),               # w3 (N padded to 128)
            pl.BlockSpec((1, NP), const),               # b3
        ],
        out_specs=pl.BlockSpec((TB, NP), lambda i: (i, 0)),
        compiler_params=pltpu.CompilerParams(
            dimension_semantics=("parallel",),          # batch tiles independent (v7x: 2 TCs)
            vmem_limit_bytes=32 << 20,                  # working set ~6 MiB even at TB=512
        ),
    )(x, w1p, b1p, w2p, b2p, w3p, b3p)

    # Slice off the N padding and return f32 logits like the PyTorch module.
    return out[:, :N].astype(jnp.float32)


def init_params(key):
    """Deterministic init mimicking nn.Linear's uniform(-1/sqrt(fan_in), 1/sqrt(fan_in)).
    Weights stored as (in_features, out_features), biases as (1, out_features)."""
    dims = [(28 * 28, 512), (512, 512), (512, 10)]
    params = []
    for fan_in, fan_out in dims:
        key, kw, kb = jax.random.split(key, 3)
        bound = 1.0 / (fan_in ** 0.5)
        w = jax.random.uniform(kw, (fan_in, fan_out), jnp.float32, -bound, bound)
        b = jax.random.uniform(kb, (1, fan_out), jnp.float32, -bound, bound)
        params.extend([w, b])
    return tuple(params)


if __name__ == "__main__":
    key = jax.random.PRNGKey(0)
    key, kx = jax.random.split(key)
    params = init_params(key)

    # Small batch of MNIST-shaped inputs (B, C=1, H=28, W=28), NCHW like PyTorch.
    x = jax.random.normal(kx, (2, 1, 28, 28), dtype=jnp.float32)

    logits = mnist_forward(x, params)
    jax.block_until_ready(logits)
    assert logits.shape == (2, 10)

    # Plain-JAX reference of the same forward pass, mirroring the kernel's bf16 inputs,
    # f32 accumulation and bf16 logits store so the comparison is apples-to-apples.
    w1, b1, w2, b2, w3, b3 = params
    bf = lambda a: a.astype(jnp.bfloat16).astype(jnp.float32)
    hi = jax.lax.Precision.HIGHEST
    xf = bf(x.reshape(x.shape[0], -1))
    h1 = bf(jnp.maximum(jnp.dot(xf, bf(w1), precision=hi) + b1, 0.0))
    h2 = bf(jnp.maximum(jnp.dot(h1, bf(w2), precision=hi) + b2, 0.0))
    ref = bf(jnp.dot(h2, bf(w3), precision=hi) + b3)

    assert jnp.allclose(logits, ref, atol=2e-2, rtol=2e-2), (
        float(jnp.max(jnp.abs(logits - ref)))
    )

    print("KERNEL_OK")
</pallas_src>

<mosaic_0001>
module attributes {stable_mosaic.version = 11 : i64} {
  func.func @mnist_mlp_kernel(%arg0: i32, %arg1: memref<16x784xf32, #tpu.memory_space<vmem>>, %arg2: memref<784x512xbf16, #tpu.memory_space<vmem>>, %arg3: memref<1x512xf32, #tpu.memory_space<vmem>>, %arg4: memref<512x512xbf16, #tpu.memory_space<vmem>>, %arg5: memref<1x512xf32, #tpu.memory_space<vmem>>, %arg6: memref<512x128xbf16, #tpu.memory_space<vmem>>, %arg7: memref<1x128xf32, #tpu.memory_space<vmem>>, %arg8: memref<16x128xbf16, #tpu.memory_space<vmem>>) attributes {dimension_semantics = [#tpu.dimension_semantics<parallel>], iteration_bounds = array<i64: 1>, scalar_prefetch = 0 : i64, scratch_operands = 0 : i64, tpu.core_type = #tpu.core_type<tc>, window_params = [{transform_indices = @transform_0, window_bounds = array<i64: 16, 784>}, {pipeline_mode = #tpu.pipeline_mode<synchronous>, transform_indices = @transform_1, window_bounds = array<i64: 784, 512>}, {pipeline_mode = #tpu.pipeline_mode<synchronous>, transform_indices = @transform_2, window_bounds = array<i64: 1, 512>}, {pipeline_mode = #tpu.pipeline_mode<synchronous>, transform_indices = @transform_3, window_bounds = array<i64: 512, 512>}, {pipeline_mode = #tpu.pipeline_mode<synchronous>, transform_indices = @transform_4, window_bounds = array<i64: 1, 512>}, {pipeline_mode = #tpu.pipeline_mode<synchronous>, transform_indices = @transform_5, window_bounds = array<i64: 512, 128>}, {pipeline_mode = #tpu.pipeline_mode<synchronous>, transform_indices = @transform_6, window_bounds = array<i64: 1, 128>}, {transform_indices = @transform_7, window_bounds = array<i64: 16, 128>}]} {
    %c0 = arith.constant 0 : index
    %c0_0 = arith.constant 0 : index
    %0 = vector.load %arg1[%c0, %c0_0] : memref<16x784xf32, #tpu.memory_space<vmem>>, vector<16x784xf32>
    %1 = arith.truncf %0 : vector<16x784xf32> to vector<16x784xbf16>
    %c0_1 = arith.constant 0 : index
    %c0_2 = arith.constant 0 : index
    %2 = vector.load %arg2[%c0_1, %c0_2] : memref<784x512xbf16, #tpu.memory_space<vmem>>, vector<784x512xbf16>
    %cst = arith.constant dense<0.000000e+00> : vector<16x512xf32>
    %3 = tpu.matmul %1, %2, %cst {dimension_numbers = #tpu.dot_dimension_numbers<[1], [0], [0], [1], [0, 0, 1, 1], [], []>} : vector<16x784xbf16>, vector<784x512xbf16>, vector<16x512xf32> -> vector<16x512xf32>
    %c0_3 = arith.constant 0 : index
    %c0_4 = arith.constant 0 : index
    %4 = vector.load %arg3[%c0_3, %c0_4] : memref<1x512xf32, #tpu.memory_space<vmem>>, vector<1x512xf32>
    %5 = vector.broadcast %4 : vector<1x512xf32> to vector<16x512xf32>
    %6 = arith.addf %3, %5 : vector<16x512xf32>
    %cst_5 = arith.constant 0.000000e+00 : f32
    %7 = vector.broadcast %cst_5 : f32 to vector<16x512xf32>
    %8 = arith.maximumf %6, %7 : vector<16x512xf32>
    %9 = arith.truncf %8 : vector<16x512xf32> to vector<16x512xbf16>
    %c0_6 = arith.constant 0 : index
    %c0_7 = arith.constant 0 : index
    %10 = vector.load %arg4[%c0_6, %c0_7] : memref<512x512xbf16, #tpu.memory_space<vmem>>, vector<512x512xbf16>
    %cst_8 = arith.constant dense<0.000000e+00> : vector<16x512xf32>
    %11 = tpu.matmul %9, %10, %cst_8 {dimension_numbers = #tpu.dot_dimension_numbers<[1], [0], [0], [1], [0, 0, 1, 1], [], []>} : vector<16x512xbf16>, vector<512x512xbf16>, vector<16x512xf32> -> vector<16x512xf32>
    %c0_9 = arith.constant 0 : index
    %c0_10 = arith.constant 0 : index
    %12 = vector.load %arg5[%c0_9, %c0_10] : memref<1x512xf32, #tpu.memory_space<vmem>>, vector<1x512xf32>
    %13 = vector.broadcast %12 : vector<1x512xf32> to vector<16x512xf32>
    %14 = arith.addf %11, %13 : vector<16x512xf32>
    %cst_11 = arith.constant 0.000000e+00 : f32
    %15 = vector.broadcast %cst_11 : f32 to vector<16x512xf32>
    %16 = arith.maximumf %14, %15 : vector<16x512xf32>
    %17 = arith.truncf %16 : vector<16x512xf32> to vector<16x512xbf16>
    %c0_12 = arith.constant 0 : index
    %c0_13 = arith.constant 0 : index
    %18 = vector.load %arg6[%c0_12, %c0_13] : memref<512x128xbf16, #tpu.memory_space<vmem>>, vector<512x128xbf16>
    %cst_14 = arith.constant dense<0.000000e+00> : vector<16x128xf32>
    %19 = tpu.matmul %17, %18, %cst_14 {dimension_numbers = #tpu.dot_dimension_numbers<[1], [0], [0], [1], [0, 0, 1, 1], [], []>} : vector<16x512xbf16>, vector<512x128xbf16>, vector<16x128xf32> -> vector<16x128xf32>
    %c0_15 = arith.constant 0 : index
    %c0_16 = arith.constant 0 : index
    %20 = vector.load %arg7[%c0_15, %c0_16] : memref<1x128xf32, #tpu.memory_space<vmem>>, vector<1x128xf32>
    %21 = vector.broadcast %20 : vector<1x128xf32> to vector<16x128xf32>
    %22 = arith.addf %19, %21 : vector<16x128xf32>
    %23 = arith.truncf %22 : vector<16x128xf32> to vector<16x128xbf16>
    %c0_17 = arith.constant 0 : index
    %c0_18 = arith.constant 0 : index
    %24 = vector.load %arg8[%c0_17, %c0_18] : memref<16x128xbf16, #tpu.memory_space<vmem>>, vector<16x128xbf16>
    tpu.vector_store %arg8[%c0_17, %c0_18], %23 {strides = array<i32>} : memref<16x128xbf16, #tpu.memory_space<vmem>>, vector<16x128xbf16>,
    return
  }
  func.func @transform_0(%arg0: i32) -> (i32, i32) {
    %c0_i32 = arith.constant 0 : i32
    %c0_i32_0 = arith.constant 0 : i32
    return %arg0, %c0_i32 : i32, i32
  }
  func.func @transform_1(%arg0: i32) -> (i32, i32) {
    %c0_i32 = arith.constant 0 : i32
    %c0_i32_0 = arith.constant 0 : i32
    %c0_i32_1 = arith.constant 0 : i32
    return %c0_i32, %c0_i32_0 : i32, i32
  }
  func.func @transform_2(%arg0: i32) -> (i32, i32) {
    %c0_i32 = arith.constant 0 : i32
    %c0_i32_0 = arith.constant 0 : i32
    %c0_i32_1 = arith.constant 0 : i32
    return %c0_i32, %c0_i32_0 : i32, i32
  }
  func.func @transform_3(%arg0: i32) -> (i32, i32) {
    %c0_i32 = arith.constant 0 : i32
    %c0_i32_0 = arith.constant 0 : i32
    %c0_i32_1 = arith.constant 0 : i32
    return %c0_i32, %c0_i32_0 : i32, i32
  }
  func.func @transform_4(%arg0: i32) -> (i32, i32) {
    %c0_i32 = arith.constant 0 : i32
    %c0_i32_0 = arith.constant 0 : i32
    %c0_i32_1 = arith.constant 0 : i32
    return %c0_i32, %c0_i32_0 : i32, i32
  }
  func.func @transform_5(%arg0: i32) -> (i32, i32) {
    %c0_i32 = arith.constant 0 : i32
    %c0_i32_0 = arith.constant 0 : i32
    %c0_i32_1 = arith.constant 0 : i32
    return %c0_i32, %c0_i32_0 : i32, i32
  }
  func.func @transform_6(%arg0: i32) -> (i32, i32) {
    %c0_i32 = arith.constant 0 : i32
    %c0_i32_0 = arith.constant 0 : i32
    %c0_i32_1 = arith.constant 0 : i32
    return %c0_i32, %c0_i32_0 : i32, i32
  }
  func.func @transform_7(%arg0: i32) -> (i32, i32) {
    %c0_i32 = arith.constant 0 : i32
    %c0_i32_0 = arith.constant 0 : i32
    return %arg0, %c0_i32 : i32, i32
  }
}

</mosaic_0001>

<llo_original>
// kernel: mnist_forward.1
$region0: #{mnist_forward.1}
  #allocation0 [shape = 'u32[]', space=smem, size = 0x4, offset = 0x4, fixed_abs, tag = 'smem constant byte address 0x4 - core index']
  #allocation1 [shape = 'u32[144,128]{1,0:T(1,128)}', space=vmem, size = 0x12000, scoped, tag = 'internal scratch']
  %s0 = inlined_call_operand.vmem [shape: f32[2,784], index: 0, kind: input, shape index: {}]
  %s1 = inlined_call_operand.vmem [shape: bf16[784,512], index: 1, kind: input, shape index: {}]
  %s2 = inlined_call_operand.vmem [shape: f32[1,512], index: 2, kind: input, shape index: {}]
  %s3 = inlined_call_operand.vmem [shape: bf16[512,512], index: 3, kind: input, shape index: {}]
  %s4 = inlined_call_operand.vmem [shape: f32[1,512], index: 4, kind: input, shape index: {}]
  %s5 = inlined_call_operand.vmem [shape: bf16[512,128], index: 5, kind: input, shape index: {}]
  %s6 = inlined_call_operand.vmem [shape: f32[1,128], index: 6, kind: input, shape index: {}]
  %s7 = inlined_call_operand.vmem [shape: bf16[2,128], index: 7, kind: output, shape index: {}]
  %s8 = sld [smem:[#allocation0]]
  $region68: #{mnist_forward.1} parent=0
    _
  %s10 = ssub.s32 1, %s8
  %s11 = scalar_select 0, %s10, %s8
  $region1: #{mnist_forward.1} parent=0
    #allocation2 [shape = 'u8[4096]{0}', space=vmem, size = 0x1000, scoped, tag = 'output window, operand 0, single buffered']
    // Predicated region
    $region2: #{mnist_forward.1} parent=1 // pred_check
      _
    $region3: #{mnist_forward.1} parent=1 // pred_check_branch
      %13 = sbr.rel (0) target = $region5
    $region4: #{mnist_forward.1} parent=1 // pred_region
      _
    $region5: #{mnist_forward.1} parent=1 // pred_fallthru
      _
    // Predicated region
    $region6: #{mnist_forward.1} parent=1 // pred_check
      _
    $region7: #{mnist_forward.1} parent=1 // pred_check_branch
      %15 = sbr.rel (0) target = $region9
    $region8: #{mnist_forward.1} parent=1 // pred_region
      _
    $region9: #{mnist_forward.1} parent=1 // pred_fallthru
      _
    // Predicated region
    $region10: #{mnist_forward.1} parent=1 // pred_check
      _
    $region11: #{mnist_forward.1} parent=1 // pred_check_branch
      %17 = sbr.rel (0) target = $region13
    $region12: #{mnist_forward.1} parent=1 // pred_region
      _
    $region13: #{mnist_forward.1} parent=1 // pred_fallthru
      _
    // Predicated region
    $region14: #{mnist_forward.1} parent=1 // pred_check
      _
    $region15: #{mnist_forward.1} parent=1 // pred_check_branch
      %19 = sbr.rel (0) target = $region17
    $region16: #{mnist_forward.1} parent=1 // pred_region
      _
    $region17: #{mnist_forward.1} parent=1 // pred_fallthru
      _
    // Predicated region
    $region18: #{mnist_forward.1} parent=1 // pred_check
      _
    $region19: #{mnist_forward.1} parent=1 // pred_check_branch
      %21 = sbr.rel (0) target = $region21
    $region20: #{mnist_forward.1} parent=1 // pred_region
      _
    $region21: #{mnist_forward.1} parent=1 // pred_fallthru
      _
    // Predicated region
    $region22: #{mnist_forward.1} parent=1 // pred_check
      _
    $region23: #{mnist_forward.1} parent=1 // pred_check_branch
      %23 = sbr.rel (0) target = $region25
    $region24: #{mnist_forward.1} parent=1 // pred_region
      _
    $region25: #{mnist_forward.1} parent=1 // pred_fallthru
      _
    // Predicated region
    $region26: #{mnist_forward.1} parent=1 // pred_check
      _
    $region27: #{mnist_forward.1} parent=1 // pred_check_branch
      %25 = sbr.rel (0) target = $region29
    $region28: #{mnist_forward.1} parent=1 // pred_region
      _
    $region29: #{mnist_forward.1} parent=1 // pred_fallthru
      _
    %v27 = vld [vmem:[%s0] sm:$0xff]
    %v28 = vld [vmem:[%s0 + $0x8] sm:$0x3f]
    %v29 = vld [vmem:[%s0 + $0xe] sm:$0xff]
    %v30 = vld [vmem:[%s0 + $0x16] sm:$0x3f]
    %v31 = vld [vmem:[%s0 + $0x1c] sm:$0xff]
    %v32 = vld [vmem:[%s0 + $0x24] sm:$0x3f]
    %v33 = vld [vmem:[%s0 + $0x2a] sm:$0xff]
    %v34 = vld [vmem:[%s0 + $0x32] sm:$0x3f]
    %v35 = vld [vmem:[%s0 + $0x38] sm:$0xff]
    %v36 = vld [vmem:[%s0 + $0x40] sm:$0x3f]
    %v37 = vld [vmem:[%s0 + $0x46] sm:$0xff]
    %v38 = vld [vmem:[%s0 + $0x4e] sm:$0x3f]
    %v39 = vld [vmem:[%s0 + $0x54] sm:$0xff]
    %v40 = vld [vmem:[%s0 + $0x5c] sm:$0x3f]
    %v41 = vld [vmem:[%s0 + $0x62] sm:$0xff]
    %v42 = vld [vmem:[%s0 + $0x6a] sm:$0x3f]
    %v59 = vcombine.low %v27, %v29
    %v60 = vcombine.high %v27, %v29
    %v61 = vcombine.low %v31, %v33
    %v62 = vcombine.high %v31, %v33
    %v64 = vunpack.c.l.s4 1983009808
    %v65 = vunpack.c.0.s8 %v64
    %v66 = vlaneseq
    %v67 = vshrl.u32 %v66, 7
    %v68 = vsub.s32 %v65, %v67
    %v69 = vrot.slane %v59, %v68
    %v71 = vunpack.c.l.s4 1983009808
    %v72 = vunpack.c.0.s8 %v71
    %v73 = vlaneseq
    %v74 = vshrl.u32 %v73, 7
    %v75 = vsub.s32 %v72, %v74
    %v76 = vrot.slane %v60, %v75
    %v78 = vunpack.c.l.s4 1983009808
    %v79 = vunpack.c.0.s8 %v78
    %v80 = vlaneseq
    %v81 = vshrl.u32 %v80, 7
    %v82 = vsub.s32 %v79, %v81
    %v83 = vrot.slane %v61, %v82
    %v85 = vunpack.c.l.s4 1983009808
    %v86 = vunpack.c.0.s8 %v85
    %v87 = vlaneseq
    %v88 = vshrl.u32 %v87, 7
    %v89 = vsub.s32 %v86, %v88
    %v90 = vrot.slane %v62, %v89
    %v91 = vcombine.low %v69, %v83
    %v92 = vcombine.high %v69, %v83
    %v93 = vcombine.low %v76, %v90
    %v94 = vcombine.high %v76, %v90
    %v95 = vcombine.low %v28, %v30
    %v96 = vcombine.high %v28, %v30
    %v97 = vcombine.low %v32, %v34
    %v98 = vcombine.high %v32, %v34
    %v100 = vunpack.c.l.s4 1983009808
    %v101 = vunpack.c.0.s8 %v100
    %v102 = vlaneseq
    %v103 = vshrl.u32 %v102, 7
    %v104 = vsub.s32 %v101, %v103
    %v105 = vrot.slane %v95, %v104
    %v107 = vunpack.c.l.s4 1983009808
    %v108 = vunpack.c.0.s8 %v107
    %v109 = vlaneseq
    %v110 = vshrl.u32 %v109, 7
    %v111 = vsub.s32 %v108, %v110
    %v112 = vrot.slane %v96, %v111
    %v114 = vunpack.c.l.s4 1983009808
    %v115 = vunpack.c.0.s8 %v114
    %v116 = vlaneseq
    %v117 = vshrl.u32 %v116, 7
    %v118 = vsub.s32 %v115, %v117
    %v119 = vrot.slane %v97, %v118
    %v121 = vunpack.c.l.s4 1983009808
    %v122 = vunpack.c.0.s8 %v121
    %v123 = vlaneseq
    %v124 = vshrl.u32 %v123, 7
    %v125 = vsub.s32 %v122, %v124
    %v126 = vrot.slane %v98, %v125
    %v127 = vcombine.low %v105, %v119
    %v128 = vcombine.high %v105, %v119
    %v129 = vcombine.low %v112, %v126
    %v130 = vcombine.low %v35, %v37
    %v131 = vcombine.high %v35, %v37
    %v132 = vcombine.low %v39, %v41
    %v133 = vcombine.high %v39, %v41
    %v135 = vunpack.c.l.s4 1983009808
    %v136 = vunpack.c.0.s8 %v135
    %v137 = vlaneseq
    %v138 = vshrl.u32 %v137, 7
    %v139 = vsub.s32 %v136, %v138
    %v140 = vrot.slane %v130, %v139
    %v142 = vunpack.c.l.s4 1983009808
    %v143 = vunpack.c.0.s8 %v142
    %v144 = vlaneseq
    %v145 = vshrl.u32 %v144, 7
    %v146 = vsub.s32 %v143, %v145
    %v147 = vrot.slane %v131, %v146
    %v149 = vunpack.c.l.s4 1983009808
    %v150 = vunpack.c.0.s8 %v149
    %v151 = vlaneseq
    %v152 = vshrl.u32 %v151, 7
    %v153 = vsub.s32 %v150, %v152
    %v154 = vrot.slane %v132, %v153
    %v156 = vunpack.c.l.s4 1983009808
    %v157 = vunpack.c.0.s8 %v156
    %v158 = vlaneseq
    %v159 = vshrl.u32 %v158, 7
    %v160 = vsub.s32 %v157, %v159
    %v161 = vrot.slane %v133, %v160
    %v162 = vcombine.low %v140, %v154
    %v163 = vcombine.high %v140, %v154
    %v164 = vcombine.low %v147, %v161
    %v165 = vcombine.high %v147, %v161
    %v166 = vcombine.low %v36, %v38
    %v167 = vcombine.high %v36, %v38
    %v168 = vcombine.low %v40, %v42
    %v169 = vcombine.high %v40, %v42
    %v171 = vunpack.c.l.s4 1983009808
    %v172 = vunpack.c.0.s8 %v171
    %v173 = vlaneseq
    %v174 = vshrl.u32 %v173, 7
    %v175 = vsub.s32 %v172, %v174
    %v176 = vrot.slane %v166, %v175
    %v178 = vunpack.c.l.s4 1983009808
    %v179 = vunpack.c.0.s8 %v178
    %v180 = vlaneseq
    %v181 = vshrl.u32 %v180, 7
    %v182 = vsub.s32 %v179, %v181
    %v183 = vrot.slane %v167, %v182
    %v185 = vunpack.c.l.s4 1983009808
    %v186 = vunpack.c.0.s8 %v185
    %v187 = vlaneseq
    %v188 = vshrl.u32 %v187, 7
    %v189 = vsub.s32 %v186, %v188
    %v190 = vrot.slane %v168, %v189
    %v192 = vunpack.c.l.s4 1983009808
    %v193 = vunpack.c.0.s8 %v192
    %v194 = vlaneseq
    %v195 = vshrl.u32 %v194, 7
    %v196 = vsub.s32 %v193, %v195
    %v197 = vrot.slane %v169, %v196
    %v198 = vcombine.low %v176, %v190
    %v199 = vcombine.high %v176, %v190
    %v200 = vcombine.low %v183, %v197
    %v215 = vpack.c.bf16 %v162, %v91
    %v216 = vpack.c.bf16 %v163, %v92
    %v217 = vpack.c.bf16 %v164, %v93
    %v218 = vpack.c.bf16 %v165, %v94
    %v219 = vpack.c.bf16 %v198, %v127
    %v220 = vpack.c.bf16 %v199, %v128
    %v221 = vpack.c.bf16 %v200, %v129
    %v222 = vld [vmem:[%s1] sm:$0xff]
    %v223 = vld [vmem:[%s1 + $0x8] sm:$0xff]
    %v224 = vld [vmem:[%s1 + $0x10] sm:$0xff]
    %v225 = vld [vmem:[%s1 + $0x18] sm:$0xff]
    %v226 = vld [vmem:[%s1 + $0x20] sm:$0xff]
    %v227 = vld [vmem:[%s1 + $0x28] sm:$0xff]
    %v228 = vld [vmem:[%s1 + $0x30] sm:$0xff]
    %v229 = vld [vmem:[%s1 + $0x38] sm:$0xff]
    %v230 = vld [vmem:[%s1 + $0x40] sm:$0xff]
    %v231 = vld [vmem:[%s1 + $0x48] sm:$0xff]
    %v232 = vld [vmem:[%s1 + $0x50] sm:$0xff]
    %v233 = vld [vmem:[%s1 + $0x58] sm:$0xff]
    %v234 = vld [vmem:[%s1 + $0x60] sm:$0xff]
    %v235 = vld [vmem:[%s1 + $0x68] sm:$0xff]
    %v236 = vld [vmem:[%s1 + $0x70] sm:$0xff]
    %v237 = vld [vmem:[%s1 + $0x78] sm:$0xff]
    %v238 = vld [vmem:[%s1 + $0x80] sm:$0xff]
    %v239 = vld [vmem:[%s1 + $0x88] sm:$0xff]
    %v240 = vld [vmem:[%s1 + $0x90] sm:$0xff]
    %v241 = vld [vmem:[%s1 + $0x98] sm:$0xff]
    %v242 = vld [vmem:[%s1 + $0xa0] sm:$0xff]
    %v243 = vld [vmem:[%s1 + $0xa8] sm:$0xff]
    %v244 = vld [vmem:[%s1 + $0xb0] sm:$0xff]
    %v245 = vld [vmem:[%s1 + $0xb8] sm:$0xff]
    %v246 = vld [vmem:[%s1 + $0xc0] sm:$0xff]
    %v247 = vld [vmem:[%s1 + $0xc8] sm:$0xff]
    %v248 = vld [vmem:[%s1 + $0xd0] sm:$0xff]
    %v249 = vld [vmem:[%s1 + $0xd8] sm:$0xff]
    %v250 = vld [vmem:[%s1 + $0xe0] sm:$0xff]
    %v251 = vld [vmem:[%s1 + $0xe8] sm:$0xff]
    %v252 = vld [vmem:[%s1 + $0xf0] sm:$0xff]
    %v253 = vld [vmem:[%s1 + $0xf8] sm:$0xff]
    %v254 = vld [vmem:[%s1 + $0x100] sm:$0xff]
    %v255 = vld [vmem:[%s1 + $0x108] sm:$0xff]
    %v256 = vld [vmem:[%s1 + $0x110] sm:$0xff]
    %v257 = vld [vmem:[%s1 + $0x118] sm:$0xff]
    %v258 = vld [vmem:[%s1 + $0x120] sm:$0xff]
    %v259 = vld [vmem:[%s1 + $0x128] sm:$0xff]
    %v260 = vld [vmem:[%s1 + $0x130] sm:$0xff]
    %v261 = vld [vmem:[%s1 + $0x138] sm:$0xff]
    %v262 = vld [vmem:[%s1 + $0x140] sm:$0xff]
    %v263 = vld [vmem:[%s1 + $0x148] sm:$0xff]
    %v264 = vld [vmem:[%s1 + $0x150] sm:$0xff]
    %v265 = vld [vmem:[%s1 + $0x158] sm:$0xff]
    %v266 = vld [vmem:[%s1 + $0x160] sm:$0xff]
    %v267 = vld [vmem:[%s1 + $0x168] sm:$0xff]
    %v268 = vld [vmem:[%s1 + $0x170] sm:$0xff]
    %v269 = vld [vmem:[%s1 + $0x178] sm:$0xff]
    %v270 = vld [vmem:[%s1 + $0x180] sm:$0xff]
    %v271 = vld [vmem:[%s1 + $0x188] sm:$0xff]
    %v272 = vld [vmem:[%s1 + $0x190] sm:$0xff]
    %v273 = vld [vmem:[%s1 + $0x198] sm:$0xff]
    %v274 = vld [vmem:[%s1 + $0x1a0] sm:$0xff]
    %v275 = vld [vmem:[%s1 + $0x1a8] sm:$0xff]
    %v276 = vld [vmem:[%s1 + $0x1b0] sm:$0xff]
    %v277 = vld [vmem:[%s1 + $0x1b8] sm:$0xff]
    %v278 = vld [vmem:[%s1 + $0x1c0] sm:$0xff]
    %v279 = vld [vmem:[%s1 + $0x1c8] sm:$0xff]
    %v280 = vld [vmem:[%s1 + $0x1d0] sm:$0xff]
    %v281 = vld [vmem:[%s1 + $0x1d8] sm:$0xff]
    %v282 = vld [vmem:[%s1 + $0x1e0] sm:$0xff]
    %v283 = vld [vmem:[%s1 + $0x1e8] sm:$0xff]
    %v284 = vld [vmem:[%s1 + $0x1f0] sm:$0xff]
    %v285 = vld [vmem:[%s1 + $0x1f8] sm:$0xff]
    %v286 = vld [vmem:[%s1 + $0x200] sm:$0xff]
    %v287 = vld [vmem:[%s1 + $0x208] sm:$0xff]
    %v288 = vld [vmem:[%s1 + $0x210] sm:$0xff]
    %v289 = vld [vmem:[%s1 + $0x218] sm:$0xff]
    %v290 = vld [vmem:[%s1 + $0x220] sm:$0xff]
    %v291 = vld [vmem:[%s1 + $0x228] sm:$0xff]
    %v292 = vld [vmem:[%s1 + $0x230] sm:$0xff]
    %v293 = vld [vmem:[%s1 + $0x238] sm:$0xff]
    %v294 = vld [vmem:[%s1 + $0x240] sm:$0xff]
    %v295 = vld [vmem:[%s1 + $0x248] sm:$0xff]
    %v296 = vld [vmem:[%s1 + $0x250] sm:$0xff]
    %v297 = vld [vmem:[%s1 + $0x258] sm:$0xff]
    %v298 = vld [vmem:[%s1 + $0x260] sm:$0xff]
    %v299 = vld [vmem:[%s1 + $0x268] sm:$0xff]
    %v300 = vld [vmem:[%s1 + $0x270] sm:$0xff]
    %v301 = vld [vmem:[%s1 + $0x278] sm:$0xff]
    %v302 = vld [vmem:[%s1 + $0x280] sm:$0xff]
    %v303 = vld [vmem:[%s1 + $0x288] sm:$0xff]
    %v304 = vld [vmem:[%s1 + $0x290] sm:$0xff]
    %v305 = vld [vmem:[%s1 + $0x298] sm:$0xff]
    %v306 = vld [vmem:[%s1 + $0x2a0] sm:$0xff]
    %v307 = vld [vmem:[%s1 + $0x2a8] sm:$0xff]
    %v308 = vld [vmem:[%s1 + $0x2b0] sm:$0xff]
    %v309 = vld [vmem:[%s1 + $0x2b8] sm:$0xff]
    %v310 = vld [vmem:[%s1 + $0x2c0] sm:$0xff]
    %v311 = vld [vmem:[%s1 + $0x2c8] sm:$0xff]
    %v312 = vld [vmem:[%s1 + $0x2d0] sm:$0xff]
    %v313 = vld [vmem:[%s1 + $0x2d8] sm:$0xff]
    %v314 = vld [vmem:[%s1 + $0x2e0] sm:$0xff]
    %v315 = vld [vmem:[%s1 + $0x2e8] sm:$0xff]
    %v316 = vld [vmem:[%s1 + $0x2f0] sm:$0xff]
    %v317 = vld [vmem:[%s1 + $0x2f8] sm:$0xff]
    %v318 = vld [vmem:[%s1 + $0x300] sm:$0xff]
    %v319 = vld [vmem:[%s1 + $0x308] sm:$0xff]
    %v320 = vld [vmem:[%s1 + $0x310] sm:$0xff]
    %v321 = vld [vmem:[%s1 + $0x318] sm:$0xff]
    %v322 = vld [vmem:[%s1 + $0x320] sm:$0xff]
    %v323 = vld [vmem:[%s1 + $0x328] sm:$0xff]
    %v324 = vld [vmem:[%s1 + $0x330] sm:$0xff]
    %v325 = vld [vmem:[%s1 + $0x338] sm:$0xff]
    %v326 = vld [vmem:[%s1 + $0x340] sm:$0xff]
    %v327 = vld [vmem:[%s1 + $0x348] sm:$0xff]
    %v328 = vld [vmem:[%s1 + $0x350] sm:$0xff]
    %v329 = vld [vmem:[%s1 + $0x358] sm:$0xff]
    %v330 = vld [vmem:[%s1 + $0x360] sm:$0xff]
    %v331 = vld [vmem:[%s1 + $0x368] sm:$0xff]
    %v332 = vld [vmem:[%s1 + $0x370] sm:$0xff]
    %v333 = vld [vmem:[%s1 + $0x378] sm:$0xff]
    %v334 = vld [vmem:[%s1 + $0x380] sm:$0xff]
    %v335 = vld [vmem:[%s1 + $0x388] sm:$0xff]
    %v336 = vld [vmem:[%s1 + $0x390] sm:$0xff]
    %v337 = vld [vmem:[%s1 + $0x398] sm:$0xff]
    %v338 = vld [vmem:[%s1 + $0x3a0] sm:$0xff]
    %v339 = vld [vmem:[%s1 + $0x3a8] sm:$0xff]
    %v340 = vld [vmem:[%s1 + $0x3b0] sm:$0xff]
    %v341 = vld [vmem:[%s1 + $0x3b8] sm:$0xff]
    %v342 = vld [vmem:[%s1 + $0x3c0] sm:$0xff]
    %v343 = vld [vmem:[%s1 + $0x3c8] sm:$0xff]
    %v344 = vld [vmem:[%s1 + $0x3d0] sm:$0xff]
    %v345 = vld [vmem:[%s1 + $0x3d8] sm:$0xff]
    %v346 = vld [vmem:[%s1 + $0x3e0] sm:$0xff]
    %v347 = vld [vmem:[%s1 + $0x3e8] sm:$0xff]
    %v348 = vld [vmem:[%s1 + $0x3f0] sm:$0xff]
    %v349 = vld [vmem:[%s1 + $0x3f8] sm:$0xff]
    %v350 = vld [vmem:[%s1 + $0x400] sm:$0xff]
    %v351 = vld [vmem:[%s1 + $0x408] sm:$0xff]
    %v352 = vld [vmem:[%s1 + $0x410] sm:$0xff]
    %v353 = vld [vmem:[%s1 + $0x418] sm:$0xff]
    %v354 = vld [vmem:[%s1 + $0x420] sm:$0xff]
    %v355 = vld [vmem:[%s1 + $0x428] sm:$0xff]
    %v356 = vld [vmem:[%s1 + $0x430] sm:$0xff]
    %v357 = vld [vmem:[%s1 + $0x438] sm:$0xff]
    %v358 = vld [vmem:[%s1 + $0x440] sm:$0xff]
    %v359 = vld [vmem:[%s1 + $0x448] sm:$0xff]
    %v360 = vld [vmem:[%s1 + $0x450] sm:$0xff]
    %v361 = vld [vmem:[%s1 + $0x458] sm:$0xff]
    %v362 = vld [vmem:[%s1 + $0x460] sm:$0xff]
    %v363 = vld [vmem:[%s1 + $0x468] sm:$0xff]
    %v364 = vld [vmem:[%s1 + $0x470] sm:$0xff]
    %v365 = vld [vmem:[%s1 + $0x478] sm:$0xff]
    %v366 = vld [vmem:[%s1 + $0x480] sm:$0xff]
    %v367 = vld [vmem:[%s1 + $0x488] sm:$0xff]
    %v368 = vld [vmem:[%s1 + $0x490] sm:$0xff]
    %v369 = vld [vmem:[%s1 + $0x498] sm:$0xff]
    %v370 = vld [vmem:[%s1 + $0x4a0] sm:$0xff]
    %v371 = vld [vmem:[%s1 + $0x4a8] sm:$0xff]
    %v372 = vld [vmem:[%s1 + $0x4b0] sm:$0xff]
    %v373 = vld [vmem:[%s1 + $0x4b8] sm:$0xff]
    %v374 = vld [vmem:[%s1 + $0x4c0] sm:$0xff]
    %v375 = vld [vmem:[%s1 + $0x4c8] sm:$0xff]
    %v376 = vld [vmem:[%s1 + $0x4d0] sm:$0xff]
    %v377 = vld [vmem:[%s1 + $0x4d8] sm:$0xff]
    %v378 = vld [vmem:[%s1 + $0x4e0] sm:$0xff]
    %v379 = vld [vmem:[%s1 + $0x4e8] sm:$0xff]
    %v380 = vld [vmem:[%s1 + $0x4f0] sm:$0xff]
    %v381 = vld [vmem:[%s1 + $0x4f8] sm:$0xff]
    %v382 = vld [vmem:[%s1 + $0x500] sm:$0xff]
    %v383 = vld [vmem:[%s1 + $0x508] sm:$0xff]
    %v384 = vld [vmem:[%s1 + $0x510] sm:$0xff]
    %v385 = vld [vmem:[%s1 + $0x518] sm:$0xff]
    %v386 = vld [vmem:[%s1 + $0x520] sm:$0xff]
    %v387 = vld [vmem:[%s1 + $0x528] sm:$0xff]
    %v388 = vld [vmem:[%s1 + $0x530] sm:$0xff]
    %v389 = vld [vmem:[%s1 + $0x538] sm:$0xff]
    %v390 = vld [vmem:[%s1 + $0x540] sm:$0xff]
    %v391 = vld [vmem:[%s1 + $0x548] sm:$0xff]
    %v392 = vld [vmem:[%s1 + $0x550] sm:$0xff]
    %v393 = vld [vmem:[%s1 + $0x558] sm:$0xff]
    %v394 = vld [vmem:[%s1 + $0x560] sm:$0xff]
    %v395 = vld [vmem:[%s1 + $0x568] sm:$0xff]
    %v396 = vld [vmem:[%s1 + $0x570] sm:$0xff]
    %v397 = vld [vmem:[%s1 + $0x578] sm:$0xff]
    %v398 = vld [vmem:[%s1 + $0x580] sm:$0xff]
    %v399 = vld [vmem:[%s1 + $0x588] sm:$0xff]
    %v400 = vld [vmem:[%s1 + $0x590] sm:$0xff]
    %v401 = vld [vmem:[%s1 + $0x598] sm:$0xff]
    %v402 = vld [vmem:[%s1 + $0x5a0] sm:$0xff]
    %v403 = vld [vmem:[%s1 + $0x5a8] sm:$0xff]
    %v404 = vld [vmem:[%s1 + $0x5b0] sm:$0xff]
    %v405 = vld [vmem:[%s1 + $0x5b8] sm:$0xff]
    %v406 = vld [vmem:[%s1 + $0x5c0] sm:$0xff]
    %v407 = vld [vmem:[%s1 + $0x5c8] sm:$0xff]
    %v408 = vld [vmem:[%s1 + $0x5d0] sm:$0xff]
    %v409 = vld [vmem:[%s1 + $0x5d8] sm:$0xff]
    %v410 = vld [vmem:[%s1 + $0x5e0] sm:$0xff]
    %v411 = vld [vmem:[%s1 + $0x5e8] sm:$0xff]
    %v412 = vld [vmem:[%s1 + $0x5f0] sm:$0xff]
    %v413 = vld [vmem:[%s1 + $0x5f8] sm:$0xff]
    %v414 = vld [vmem:[%s1 + $0x600] sm:$0xff]
    %v415 = vld [vmem:[%s1 + $0x608] sm:$0xff]
    %v416 = vld [vmem:[%s1 + $0x610] sm:$0xff]
    %v417 = vld [vmem:[%s1 + $0x618] sm:$0xff]
    %v418 = vld [vmem:[%s2] sm:$0xf]
    %v420 = vlaneseq
    %v421 = vshrl.u32 %v420, 7
    %v422 = vsub.s32 0, %v421
    %v423 = vrot.slane %v418, %v422
    %v424 = vlaneseq
    %v425 = vshrl.u32 %v424, 7
    %v426 = vsub.s32 1, %v425
    %v427 = vrot.slane %v418, %v426
    %v428 = vlaneseq
    %v429 = vshrl.u32 %v428, 7
    %v430 = vsub.s32 2, %v429
    %v431 = vrot.slane %v418, %v430
    %v432 = vlaneseq
    %v433 = vshrl.u32 %v432, 7
    %v434 = vsub.s32 3, %v433
    %v435 = vrot.slane %v418, %v434
    %v636 = vunpack.c.l.b16 %v222
    %v637 = vunpack.c.h.b16 %v222
    %v638 = vunpack.c.l.b16 %v223
    %v639 = vunpack.c.h.b16 %v223
    %v640 = vunpack.c.l.b16 %v224
    %v641 = vunpack.c.h.b16 %v224
    %v642 = vunpack.c.l.b16 %v225
    %v643 = vunpack.c.h.b16 %v225
    %v644 = vunpack.c.l.b16 %v226
    %v645 = vunpack.c.h.b16 %v226
    %v646 = vunpack.c.l.b16 %v227
    %v647 = vunpack.c.h.b16 %v227
    %v648 = vunpack.c.l.b16 %v228
    %v649 = vunpack.c.h.b16 %v228
    %v650 = vunpack.c.l.b16 %v229
    %v651 = vunpack.c.h.b16 %v229
    %v652 = vunpack.c.l.b16 %v230
    %v653 = vunpack.c.h.b16 %v230
    %v654 = vunpack.c.l.b16 %v231
    %v655 = vunpack.c.h.b16 %v231
    %v656 = vunpack.c.l.b16 %v232
    %v657 = vunpack.c.h.b16 %v232
    %v658 = vunpack.c.l.b16 %v233
    %v659 = vunpack.c.h.b16 %v233
    %v660 = vunpack.c.l.b16 %v234
    %v661 = vunpack.c.h.b16 %v234
    %v662 = vunpack.c.l.b16 %v235
    %v663 = vunpack.c.h.b16 %v235
    %v664 = vunpack.c.l.b16 %v236
    %v665 = vunpack.c.h.b16 %v236
    %v666 = vunpack.c.l.b16 %v237
    %v667 = vunpack.c.h.b16 %v237
    %v668 = vunpack.c.l.b16 %v238
    %v669 = vunpack.c.h.b16 %v238
    %v670 = vunpack.c.l.b16 %v239
    %v671 = vunpack.c.h.b16 %v239
    %v672 = vunpack.c.l.b16 %v240
    %v673 = vunpack.c.h.b16 %v240
    %v674 = vunpack.c.l.b16 %v241
    %v675 = vunpack.c.h.b16 %v241
    %v676 = vunpack.c.l.b16 %v242
    %v677 = vunpack.c.h.b16 %v242
    %v678 = vunpack.c.l.b16 %v243
    %v679 = vunpack.c.h.b16 %v243
    %v680 = vunpack.c.l.b16 %v244
    %v681 = vunpack.c.h.b16 %v244
    %v682 = vunpack.c.l.b16 %v245
    %v683 = vunpack.c.h.b16 %v245
    %v684 = vunpack.c.l.b16 %v246
    %v685 = vunpack.c.h.b16 %v246
    %v686 = vunpack.c.l.b16 %v247
    %v687 = vunpack.c.h.b16 %v247
    %v688 = vunpack.c.l.b16 %v248
    %v689 = vunpack.c.h.b16 %v248
    %v690 = vunpack.c.l.b16 %v249
    %v691 = vunpack.c.h.b16 %v249
    %v692 = vunpack.c.l.b16 %v250
    %v693 = vunpack.c.h.b16 %v250
    %v694 = vunpack.c.l.b16 %v251
    %v695 = vunpack.c.h.b16 %v251
    %v696 = vunpack.c.l.b16 %v252
    %v697 = vunpack.c.h.b16 %v252
    %v698 = vunpack.c.l.b16 %v253
    %v699 = vunpack.c.h.b16 %v253
    %v700 = vunpack.c.l.b16 %v254
    %v701 = vunpack.c.h.b16 %v254
    %v702 = vunpack.c.l.b16 %v255
    %v703 = vunpack.c.h.b16 %v255
    %v704 = vunpack.c.l.b16 %v256
    %v705 = vunpack.c.h.b16 %v256
    %v706 = vunpack.c.l.b16 %v257
    %v707 = vunpack.c.h.b16 %v257
    %v708 = vunpack.c.l.b16 %v258
    %v709 = vunpack.c.h.b16 %v258
    %v710 = vunpack.c.l.b16 %v259
    %v711 = vunpack.c.h.b16 %v259
    %v712 = vunpack.c.l.b16 %v260
    %v713 = vunpack.c.h.b16 %v260
    %v714 = vunpack.c.l.b16 %v261
    %v715 = vunpack.c.h.b16 %v261
    %v716 = vunpack.c.l.b16 %v262
    %v717 = vunpack.c.h.b16 %v262
    %v718 = vunpack.c.l.b16 %v263
    %v719 = vunpack.c.h.b16 %v263
    %v720 = vunpack.c.l.b16 %v264
    %v721 = vunpack.c.h.b16 %v264
    %v722 = vunpack.c.l.b16 %v265
    %v723 = vunpack.c.h.b16 %v265
    %v724 = vunpack.c.l.b16 %v266
    %v725 = vunpack.c.h.b16 %v266
    %v726 = vunpack.c.l.b16 %v267
    %v727 = vunpack.c.h.b16 %v267
    %v728 = vunpack.c.l.b16 %v268
    %v729 = vunpack.c.h.b16 %v268
    %v730 = vunpack.c.l.b16 %v269
    %v731 = vunpack.c.h.b16 %v269
    %v732 = vunpack.c.l.b16 %v270
    %v733 = vunpack.c.h.b16 %v270
    %v734 = vunpack.c.l.b16 %v271
    %v735 = vunpack.c.h.b16 %v271
    %v736 = vunpack.c.l.b16 %v272
    %v737 = vunpack.c.h.b16 %v272
    %v738 = vunpack.c.l.b16 %v273
    %v739 = vunpack.c.h.b16 %v273
    %v740 = vunpack.c.l.b16 %v274
    %v741 = vunpack.c.h.b16 %v274
    %v742 = vunpack.c.l.b16 %v275
    %v743 = vunpack.c.h.b16 %v275
    %v744 = vunpack.c.l.b16 %v276
    %v745 = vunpack.c.h.b16 %v276
    %v746 = vunpack.c.l.b16 %v277
    %v747 = vunpack.c.h.b16 %v277
    %v748 = vunpack.c.l.b16 %v278
    %v749 = vunpack.c.h.b16 %v278
    %v750 = vunpack.c.l.b16 %v279
    %v751 = vunpack.c.h.b16 %v279
    %v752 = vunpack.c.l.b16 %v280
    %v753 = vunpack.c.h.b16 %v280
    %v754 = vunpack.c.l.b16 %v281
    %v755 = vunpack.c.h.b16 %v281
    %v756 = vunpack.c.l.b16 %v282
    %v757 = vunpack.c.h.b16 %v282
    %v758 = vunpack.c.l.b16 %v283
    %v759 = vunpack.c.h.b16 %v283
    %v760 = vunpack.c.l.b16 %v284
    %v761 = vunpack.c.h.b16 %v284
    %v762 = vunpack.c.l.b16 %v285
    %v763 = vunpack.c.h.b16 %v285
    %v764 = vunpack.c.l.b16 %v286
    %v765 = vunpack.c.h.b16 %v286
    %v766 = vunpack.c.l.b16 %v287
    %v767 = vunpack.c.h.b16 %v287
    %v768 = vunpack.c.l.b16 %v288
    %v769 = vunpack.c.h.b16 %v288
    %v770 = vunpack.c.l.b16 %v289
    %v771 = vunpack.c.h.b16 %v289
    %v772 = vunpack.c.l.b16 %v290
    %v773 = vunpack.c.h.b16 %v290
    %v774 = vunpack.c.l.b16 %v291
    %v775 = vunpack.c.h.b16 %v291
    %v776 = vunpack.c.l.b16 %v292
    %v777 = vunpack.c.h.b16 %v292
    %v778 = vunpack.c.l.b16 %v293
    %v779 = vunpack.c.h.b16 %v293
    %v780 = vunpack.c.l.b16 %v294
    %v781 = vunpack.c.h.b16 %v294
    %v782 = vunpack.c.l.b16 %v295
    %v783 = vunpack.c.h.b16 %v295
    %v784 = vunpack.c.l.b16 %v296
    %v785 = vunpack.c.h.b16 %v296
    %v786 = vunpack.c.l.b16 %v297
    %v787 = vunpack.c.h.b16 %v297
    %v788 = vunpack.c.l.b16 %v298
    %v789 = vunpack.c.h.b16 %v298
    %v790 = vunpack.c.l.b16 %v299
    %v791 = vunpack.c.h.b16 %v299
    %v792 = vunpack.c.l.b16 %v300
    %v793 = vunpack.c.h.b16 %v300
    %v794 = vunpack.c.l.b16 %v301
    %v795 = vunpack.c.h.b16 %v301
    %v796 = vunpack.c.l.b16 %v302
    %v797 = vunpack.c.h.b16 %v302
    %v798 = vunpack.c.l.b16 %v303
    %v799 = vunpack.c.h.b16 %v303
    %v800 = vunpack.c.l.b16 %v304
    %v801 = vunpack.c.h.b16 %v304
    %v802 = vunpack.c.l.b16 %v305
    %v803 = vunpack.c.h.b16 %v305
    %v804 = vunpack.c.l.b16 %v306
    %v805 = vunpack.c.h.b16 %v306
    %v806 = vunpack.c.l.b16 %v307
    %v807 = vunpack.c.h.b16 %v307
    %v808 = vunpack.c.l.b16 %v308
    %v809 = vunpack.c.h.b16 %v308
    %v810 = vunpack.c.l.b16 %v309
    %v811 = vunpack.c.h.b16 %v309
    %v812 = vunpack.c.l.b16 %v310
    %v813 = vunpack.c.h.b16 %v310
    %v814 = vunpack.c.l.b16 %v311
    %v815 = vunpack.c.h.b16 %v311
    %v816 = vunpack.c.l.b16 %v312
    %v817 = vunpack.c.h.b16 %v312
    %v818 = vunpack.c.l.b16 %v313
    %v819 = vunpack.c.h.b16 %v313
    %v820 = vunpack.c.l.b16 %v314
    %v821 = vunpack.c.h.b16 %v314
    %v822 = vunpack.c.l.b16 %v315
    %v823 = vunpack.c.h.b16 %v315
    %v824 = vunpack.c.l.b16 %v316
    %v825 = vunpack.c.h.b16 %v316
    %v826 = vunpack.c.l.b16 %v317
    %v827 = vunpack.c.h.b16 %v317
    %v828 = vunpack.c.l.b16 %v318
    %v829 = vunpack.c.h.b16 %v318
    %v830 = vunpack.c.l.b16 %v319
    %v831 = vunpack.c.h.b16 %v319
    %v832 = vunpack.c.l.b16 %v320
    %v833 = vunpack.c.h.b16 %v320
    %v834 = vunpack.c.l.b16 %v321
    %v835 = vunpack.c.h.b16 %v321
    %v836 = vunpack.c.l.b16 %v322
    %v837 = vunpack.c.h.b16 %v322
    %v838 = vunpack.c.l.b16 %v323
    %v839 = vunpack.c.h.b16 %v323
    %v840 = vunpack.c.l.b16 %v324
    %v841 = vunpack.c.h.b16 %v324
    %v842 = vunpack.c.l.b16 %v325
    %v843 = vunpack.c.h.b16 %v325
    %v844 = vunpack.c.l.b16 %v326
    %v845 = vunpack.c.h.b16 %v326
    %v846 = vunpack.c.l.b16 %v327
    %v847 = vunpack.c.h.b16 %v327
    %v848 = vunpack.c.l.b16 %v328
    %v849 = vunpack.c.h.b16 %v328
    %v850 = vunpack.c.l.b16 %v329
    %v851 = vunpack.c.h.b16 %v329
    %v852 = vunpack.c.l.b16 %v330
    %v853 = vunpack.c.h.b16 %v330
    %v854 = vunpack.c.l.b16 %v331
    %v855 = vunpack.c.h.b16 %v331
    %v856 = vunpack.c.l.b16 %v332
    %v857 = vunpack.c.h.b16 %v332
    %v858 = vunpack.c.l.b16 %v333
    %v859 = vunpack.c.h.b16 %v333
    %v860 = vunpack.c.l.b16 %v334
    %v861 = vunpack.c.h.b16 %v334
    %v862 = vunpack.c.l.b16 %v335
    %v863 = vunpack.c.h.b16 %v335
    %v864 = vunpack.c.l.b16 %v336
    %v865 = vunpack.c.h.b16 %v336
    %v866 = vunpack.c.l.b16 %v337
    %v867 = vunpack.c.h.b16 %v337
    %v868 = vunpack.c.l.b16 %v338
    %v869 = vunpack.c.h.b16 %v338
    %v870 = vunpack.c.l.b16 %v339
    %v871 = vunpack.c.h.b16 %v339
    %v872 = vunpack.c.l.b16 %v340
    %v873 = vunpack.c.h.b16 %v340
    %v874 = vunpack.c.l.b16 %v341
    %v875 = vunpack.c.h.b16 %v341
    %v876 = vunpack.c.l.b16 %v342
    %v877 = vunpack.c.h.b16 %v342
    %v878 = vunpack.c.l.b16 %v343
    %v879 = vunpack.c.h.b16 %v343
    %v880 = vunpack.c.l.b16 %v344
    %v881 = vunpack.c.h.b16 %v344
    %v882 = vunpack.c.l.b16 %v345
    %v883 = vunpack.c.h.b16 %v345
    %v884 = vunpack.c.l.b16 %v346
    %v885 = vunpack.c.h.b16 %v346
    %v886 = vunpack.c.l.b16 %v347
    %v887 = vunpack.c.h.b16 %v347
    %v888 = vunpack.c.l.b16 %v348
    %v889 = vunpack.c.h.b16 %v348
    %v890 = vunpack.c.l.b16 %v349
    %v891 = vunpack.c.h.b16 %v349
    %v892 = vunpack.c.l.b16 %v350
    %v893 = vunpack.c.h.b16 %v350
    %v894 = vunpack.c.l.b16 %v351
    %v895 = vunpack.c.h.b16 %v351
    %v896 = vunpack.c.l.b16 %v352
    %v897 = vunpack.c.h.b16 %v352
    %v898 = vunpack.c.l.b16 %v353
    %v899 = vunpack.c.h.b16 %v353
    %v900 = vunpack.c.l.b16 %v354
    %v901 = vunpack.c.h.b16 %v354
    %v902 = vunpack.c.l.b16 %v355
    %v903 = vunpack.c.h.b16 %v355
    %v904 = vunpack.c.l.b16 %v356
    %v905 = vunpack.c.h.b16 %v356
    %v906 = vunpack.c.l.b16 %v357
    %v907 = vunpack.c.h.b16 %v357
    %v908 = vunpack.c.l.b16 %v358
    %v909 = vunpack.c.h.b16 %v358
    %v910 = vunpack.c.l.b16 %v359
    %v911 = vunpack.c.h.b16 %v359
    %v912 = vunpack.c.l.b16 %v360
    %v913 = vunpack.c.h.b16 %v360
    %v914 = vunpack.c.l.b16 %v361
    %v915 = vunpack.c.h.b16 %v361
    %v916 = vunpack.c.l.b16 %v362
    %v917 = vunpack.c.h.b16 %v362
    %v918 = vunpack.c.l.b16 %v363
    %v919 = vunpack.c.h.b16 %v363
    %v920 = vunpack.c.l.b16 %v364
    %v921 = vunpack.c.h.b16 %v364
    %v922 = vunpack.c.l.b16 %v365
    %v923 = vunpack.c.h.b16 %v365
    %v924 = vunpack.c.l.b16 %v366
    %v925 = vunpack.c.h.b16 %v366
    %v926 = vunpack.c.l.b16 %v367
    %v927 = vunpack.c.h.b16 %v367
    %v928 = vunpack.c.l.b16 %v368
    %v929 = vunpack.c.h.b16 %v368
    %v930 = vunpack.c.l.b16 %v369
    %v931 = vunpack.c.h.b16 %v369
    %v932 = vunpack.c.l.b16 %v370
    %v933 = vunpack.c.h.b16 %v370
    %v934 = vunpack.c.l.b16 %v371
    %v935 = vunpack.c.h.b16 %v371
    %v936 = vunpack.c.l.b16 %v372
    %v937 = vunpack.c.h.b16 %v372
    %v938 = vunpack.c.l.b16 %v373
    %v939 = vunpack.c.h.b16 %v373
    %v940 = vunpack.c.l.b16 %v374
    %v941 = vunpack.c.h.b16 %v374
    %v942 = vunpack.c.l.b16 %v375
    %v943 = vunpack.c.h.b16 %v375
    %v944 = vunpack.c.l.b16 %v376
    %v945 = vunpack.c.h.b16 %v376
    %v946 = vunpack.c.l.b16 %v377
    %v947 = vunpack.c.h.b16 %v377
    %v948 = vunpack.c.l.b16 %v378
    %v949 = vunpack.c.h.b16 %v378
    %v950 = vunpack.c.l.b16 %v379
    %v951 = vunpack.c.h.b16 %v379
    %v952 = vunpack.c.l.b16 %v380
    %v953 = vunpack.c.h.b16 %v380
    %v954 = vunpack.c.l.b16 %v381
    %v955 = vunpack.c.h.b16 %v381
    %v956 = vunpack.c.l.b16 %v382
    %v957 = vunpack.c.h.b16 %v382
    %v958 = vunpack.c.l.b16 %v383
    %v959 = vunpack.c.h.b16 %v383
    %v960 = vunpack.c.l.b16 %v384
    %v961 = vunpack.c.h.b16 %v384
    %v962 = vunpack.c.l.b16 %v385
    %v963 = vunpack.c.h.b16 %v385
    %v964 = vunpack.c.l.b16 %v386
    %v965 = vunpack.c.h.b16 %v386
    %v966 = vunpack.c.l.b16 %v387
    %v967 = vunpack.c.h.b16 %v387
    %v968 = vunpack.c.l.b16 %v388
    %v969 = vunpack.c.h.b16 %v388
    %v970 = vunpack.c.l.b16 %v389
    %v971 = vunpack.c.h.b16 %v389
    %v972 = vunpack.c.l.b16 %v390
    %v973 = vunpack.c.h.b16 %v390
    %v974 = vunpack.c.l.b16 %v391
    %v975 = vunpack.c.h.b16 %v391
    %v976 = vunpack.c.l.b16 %v392
    %v977 = vunpack.c.h.b16 %v392
    %v978 = vunpack.c.l.b16 %v393
    %v979 = vunpack.c.h.b16 %v393
    %v980 = vunpack.c.l.b16 %v394
    %v981 = vunpack.c.h.b16 %v394
    %v982 = vunpack.c.l.b16 %v395
    %v983 = vunpack.c.h.b16 %v395
    %v984 = vunpack.c.l.b16 %v396
    %v985 = vunpack.c.h.b16 %v396
    %v986 = vunpack.c.l.b16 %v397
    %v987 = vunpack.c.h.b16 %v397
    %v988 = vunpack.c.l.b16 %v398
    %v989 = vunpack.c.h.b16 %v398
    %v990 = vunpack.c.l.b16 %v399
    %v991 = vunpack.c.h.b16 %v399
    %v992 = vunpack.c.l.b16 %v400
    %v993 = vunpack.c.h.b16 %v400
    %v994 = vunpack.c.l.b16 %v401
    %v995 = vunpack.c.h.b16 %v401
    %v996 = vunpack.c.l.b16 %v402
    %v997 = vunpack.c.h.b16 %v402
    %v998 = vunpack.c.l.b16 %v403
    %v999 = vunpack.c.h.b16 %v403
    %v1000 = vunpack.c.l.b16 %v404
    %v1001 = vunpack.c.h.b16 %v404
    %v1002 = vunpack.c.l.b16 %v405
    %v1003 = vunpack.c.h.b16 %v405
    %v1004 = vunpack.c.l.b16 %v406
    %v1005 = vunpack.c.h.b16 %v406
    %v1006 = vunpack.c.l.b16 %v407
    %v1007 = vunpack.c.h.b16 %v407
    %v1008 = vunpack.c.l.b16 %v408
    %v1009 = vunpack.c.h.b16 %v408
    %v1010 = vunpack.c.l.b16 %v409
    %v1011 = vunpack.c.h.b16 %v409
    %v1012 = vunpack.c.l.b16 %v410
    %v1013 = vunpack.c.h.b16 %v410
    %v1014 = vunpack.c.l.b16 %v411
    %v1015 = vunpack.c.h.b16 %v411
    %v1016 = vunpack.c.l.b16 %v412
    %v1017 = vunpack.c.h.b16 %v412
    %v1018 = vunpack.c.l.b16 %v413
    %v1019 = vunpack.c.h.b16 %v413
    %v1020 = vunpack.c.l.b16 %v414
    %v1021 = vunpack.c.h.b16 %v414
    %v1022 = vunpack.c.l.b16 %v415
    %v1023 = vunpack.c.h.b16 %v415
    %v1024 = vunpack.c.l.b16 %v416
    %v1025 = vunpack.c.h.b16 %v416
    %v1026 = vunpack.c.l.b16 %v417
    %v1027 = vunpack.c.h.b16 %v417
    %v1028 = vpack.c.b16 %v640, %v636
    %v1029 = vpack.c.b16 %v641, %v637
    %v1030 = vpack.c.b16 %v642, %v638
    %v1031 = vpack.c.b16 %v643, %v639
    %v1032 = vpack.c.b16 %v648, %v644
    %v1033 = vpack.c.b16 %v649, %v645
    %v1034 = vpack.c.b16 %v650, %v646
    %v1035 = vpack.c.b16 %v651, %v647
    %v1036 = vpack.c.b16 %v656, %v652
    %v1037 = vpack.c.b16 %v657, %v653
    %v1038 = vpack.c.b16 %v658, %v654
    %v1039 = vpack.c.b16 %v659, %v655
    %v1040 = vpack.c.b16 %v664, %v660
    %v1041 = vpack.c.b16 %v665, %v661
    %v1042 = vpack.c.b16 %v666, %v662
    %v1043 = vpack.c.b16 %v667, %v663
    %v1044 = vpack.c.b16 %v672, %v668
    %v1045 = vpack.c.b16 %v673, %v669
    %v1046 = vpack.c.b16 %v674, %v670
    %v1047 = vpack.c.b16 %v675, %v671
    %v1048 = vpack.c.b16 %v680, %v676
    %v1049 = vpack.c.b16 %v681, %v677
    %v1050 = vpack.c.b16 %v682, %v678
    %v1051 = vpack.c.b16 %v683, %v679
    %v1052 = vpack.c.b16 %v688, %v684
    %v1053 = vpack.c.b16 %v689, %v685
    %v1054 = vpack.c.b16 %v690, %v686
    %v1055 = vpack.c.b16 %v691, %v687
    %v1056 = vpack.c.b16 %v696, %v692
    %v1057 = vpack.c.b16 %v697, %v693
    %v1058 = vpack.c.b16 %v698, %v694
    %v1059 = vpack.c.b16 %v699, %v695
    %v1060 = vpack.c.b16 %v704, %v700
    %v1061 = vpack.c.b16 %v705, %v701
    %v1062 = vpack.c.b16 %v706, %v702
    %v1063 = vpack.c.b16 %v707, %v703
    %v1064 = vpack.c.b16 %v712, %v708
    %v1065 = vpack.c.b16 %v713, %v709
    %v1066 = vpack.c.b16 %v714, %v710
    %v1067 = vpack.c.b16 %v715, %v711
    %v1068 = vpack.c.b16 %v720, %v716
    %v1069 = vpack.c.b16 %v721, %v717
    %v1070 = vpack.c.b16 %v722, %v718
    %v1071 = vpack.c.b16 %v723, %v719
    %v1072 = vpack.c.b16 %v728, %v724
    %v1073 = vpack.c.b16 %v729, %v725
    %v1074 = vpack.c.b16 %v730, %v726
    %v1075 = vpack.c.b16 %v731, %v727
    %v1076 = vpack.c.b16 %v736, %v732
    %v1077 = vpack.c.b16 %v737, %v733
    %v1078 = vpack.c.b16 %v738, %v734
    %v1079 = vpack.c.b16 %v739, %v735
    %v1080 = vpack.c.b16 %v744, %v740
    %v1081 = vpack.c.b16 %v745, %v741
    %v1082 = vpack.c.b16 %v746, %v742
    %v1083 = vpack.c.b16 %v747, %v743
    %v1084 = vpack.c.b16 %v752, %v748
    %v1085 = vpack.c.b16 %v753, %v749
    %v1086 = vpack.c.b16 %v754, %v750
    %v1087 = vpack.c.b16 %v755, %v751
    %v1088 = vpack.c.b16 %v760, %v756
    %v1089 = vpack.c.b16 %v761, %v757
    %v1090 = vpack.c.b16 %v762, %v758
    %v1091 = vpack.c.b16 %v763, %v759
    %v1092 = vpack.c.b16 %v768, %v764
    %v1093 = vpack.c.b16 %v769, %v765
    %v1094 = vpack.c.b16 %v770, %v766
    %v1095 = vpack.c.b16 %v771, %v767
    %v1096 = vpack.c.b16 %v776, %v772
    %v1097 = vpack.c.b16 %v777, %v773
    %v1098 = vpack.c.b16 %v778, %v774
    %v1099 = vpack.c.b16 %v779, %v775
    %v1100 = vpack.c.b16 %v784, %v780
    %v1101 = vpack.c.b16 %v785, %v781
    %v1102 = vpack.c.b16 %v786, %v782
    %v1103 = vpack.c.b16 %v787, %v783
    %v1104 = vpack.c.b16 %v792, %v788
    %v1105 = vpack.c.b16 %v793, %v789
    %v1106 = vpack.c.b16 %v794, %v790
    %v1107 = vpack.c.b16 %v795, %v791
    %v1108 = vpack.c.b16 %v800, %v796
    %v1109 = vpack.c.b16 %v801, %v797
    %v1110 = vpack.c.b16 %v802, %v798
    %v1111 = vpack.c.b16 %v803, %v799
    %v1112 = vpack.c.b16 %v808, %v804
    %v1113 = vpack.c.b16 %v809, %v805
    %v1114 = vpack.c.b16 %v810, %v806
    %v1115 = vpack.c.b16 %v811, %v807
    %v1116 = vpack.c.b16 %v816, %v812
    %v1117 = vpack.c.b16 %v817, %v813
    %v1118 = vpack.c.b16 %v818, %v814
    %v1119 = vpack.c.b16 %v819, %v815
    %v1120 = vpack.c.b16 %v824, %v820
    %v1121 = vpack.c.b16 %v825, %v821
    %v1122 = vpack.c.b16 %v826, %v822
    %v1123 = vpack.c.b16 %v827, %v823
    %v1124 = vpack.c.b16 %v832, %v828
    %v1125 = vpack.c.b16 %v833, %v829
    %v1126 = vpack.c.b16 %v834, %v830
    %v1127 = vpack.c.b16 %v835, %v831
    %v1128 = vpack.c.b16 %v840, %v836
    %v1129 = vpack.c.b16 %v841, %v837
    %v1130 = vpack.c.b16 %v842, %v838
    %v1131 = vpack.c.b16 %v843, %v839
    %v1132 = vpack.c.b16 %v848, %v844
    %v1133 = vpack.c.b16 %v849, %v845
    %v1134 = vpack.c.b16 %v850, %v846
    %v1135 = vpack.c.b16 %v851, %v847
    %v1136 = vpack.c.b16 %v856, %v852
    %v1137 = vpack.c.b16 %v857, %v853
    %v1138 = vpack.c.b16 %v858, %v854
    %v1139 = vpack.c.b16 %v859, %v855
    %v1140 = vpack.c.b16 %v864, %v860
    %v1141 = vpack.c.b16 %v865, %v861
    %v1142 = vpack.c.b16 %v866, %v862
    %v1143 = vpack.c.b16 %v867, %v863
    %v1144 = vpack.c.b16 %v872, %v868
    %v1145 = vpack.c.b16 %v873, %v869
    %v1146 = vpack.c.b16 %v874, %v870
    %v1147 = vpack.c.b16 %v875, %v871
    %v1148 = vpack.c.b16 %v880, %v876
    %v1149 = vpack.c.b16 %v881, %v877
    %v1150 = vpack.c.b16 %v882, %v878
    %v1151 = vpack.c.b16 %v883, %v879
    %v1152 = vpack.c.b16 %v888, %v884
    %v1153 = vpack.c.b16 %v889, %v885
    %v1154 = vpack.c.b16 %v890, %v886
    %v1155 = vpack.c.b16 %v891, %v887
    %v1156 = vpack.c.b16 %v896, %v892
    %v1157 = vpack.c.b16 %v897, %v893
    %v1158 = vpack.c.b16 %v898, %v894
    %v1159 = vpack.c.b16 %v899, %v895
    %v1160 = vpack.c.b16 %v904, %v900
    %v1161 = vpack.c.b16 %v905, %v901
    %v1162 = vpack.c.b16 %v906, %v902
    %v1163 = vpack.c.b16 %v907, %v903
    %v1164 = vpack.c.b16 %v912, %v908
    %v1165 = vpack.c.b16 %v913, %v909
    %v1166 = vpack.c.b16 %v914, %v910
    %v1167 = vpack.c.b16 %v915, %v911
    %v1168 = vpack.c.b16 %v920, %v916
    %v1169 = vpack.c.b16 %v921, %v917
    %v1170 = vpack.c.b16 %v922, %v918
    %v1171 = vpack.c.b16 %v923, %v919
    %v1172 = vpack.c.b16 %v928, %v924
    %v1173 = vpack.c.b16 %v929, %v925
    %v1174 = vpack.c.b16 %v930, %v926
    %v1175 = vpack.c.b16 %v931, %v927
    %v1176 = vpack.c.b16 %v936, %v932
    %v1177 = vpack.c.b16 %v937, %v933
    %v1178 = vpack.c.b16 %v938, %v934
    %v1179 = vpack.c.b16 %v939, %v935
    %v1180 = vpack.c.b16 %v944, %v940
    %v1181 = vpack.c.b16 %v945, %v941
    %v1182 = vpack.c.b16 %v946, %v942
    %v1183 = vpack.c.b16 %v947, %v943
    %v1184 = vpack.c.b16 %v952, %v948
    %v1185 = vpack.c.b16 %v953, %v949
    %v1186 = vpack.c.b16 %v954, %v950
    %v1187 = vpack.c.b16 %v955, %v951
    %v1188 = vpack.c.b16 %v960, %v956
    %v1189 = vpack.c.b16 %v961, %v957
    %v1190 = vpack.c.b16 %v962, %v958
    %v1191 = vpack.c.b16 %v963, %v959
    %v1192 = vpack.c.b16 %v968, %v964
    %v1193 = vpack.c.b16 %v969, %v965
    %v1194 = vpack.c.b16 %v970, %v966
    %v1195 = vpack.c.b16 %v971, %v967
    %v1196 = vpack.c.b16 %v976, %v972
    %v1197 = vpack.c.b16 %v977, %v973
    %v1198 = vpack.c.b16 %v978, %v974
    %v1199 = vpack.c.b16 %v979, %v975
    %v1200 = vpack.c.b16 %v984, %v980
    %v1201 = vpack.c.b16 %v985, %v981
    %v1202 = vpack.c.b16 %v986, %v982
    %v1203 = vpack.c.b16 %v987, %v983
    %v1204 = vpack.c.b16 %v992, %v988
    %v1205 = vpack.c.b16 %v993, %v989
    %v1206 = vpack.c.b16 %v994, %v990
    %v1207 = vpack.c.b16 %v995, %v991
    %v1208 = vpack.c.b16 %v1000, %v996
    %v1209 = vpack.c.b16 %v1001, %v997
    %v1210 = vpack.c.b16 %v1002, %v998
    %v1211 = vpack.c.b16 %v1003, %v999
    %v1212 = vpack.c.b16 %v1008, %v1004
    %v1213 = vpack.c.b16 %v1009, %v1005
    %v1214 = vpack.c.b16 %v1010, %v1006
    %v1215 = vpack.c.b16 %v1011, %v1007
    %v1216 = vpack.c.b16 %v1016, %v1012
    %v1217 = vpack.c.b16 %v1017, %v1013
    %v1218 = vpack.c.b16 %v1018, %v1014
    %v1219 = vpack.c.b16 %v1019, %v1015
    %v1220 = vpack.c.b16 %v1024, %v1020
    %v1221 = vpack.c.b16 %v1025, %v1021
    %v1222 = vpack.c.b16 %v1026, %v1022
    %v1223 = vpack.c.b16 %v1027, %v1023
    %vm1420 = vcmask 130048
    %v1422 = vsel %vm1420, %v221, 0
    %1424 = vmatprep.subr.bf16.mxu0 %v1029
    %1425 = vmatpush1.bf16.msra.mxu0 %v1028
    %1426 = vmatprep.subr.bf16.mxu0 %v1033
    %1427 = vmatpush1.bf16.msra.mxu0 %v1032
    %1428 = vmatprep.subr.bf16.mxu0 %v1037
    %1429 = vmatpush1.bf16.msra.mxu0 %v1036
    %1430 = vmatprep.subr.bf16.mxu0 %v1041
    %1431 = vmatpush1.bf16.msra.mxu0 %v1040
    %1432 = vmatprep.subr.bf16.mxu0 %v1045
    %1433 = vmatpush1.bf16.msra.mxu0 %v1044
    %1434 = vmatprep.subr.bf16.mxu0 %v1049
    %1435 = vmatpush1.bf16.msra.mxu0 %v1048
    %1436 = vmatprep.subr.bf16.mxu0 %v1053
    %1437 = vmatpush1.bf16.msra.mxu0 %v1052
    %1438 = vmatprep.subr.bf16.mxu0 %v1057
    %1439 = vmatpush1.bf16.msra.mxu0 %v1056
    %1440 = vmatprep.subr.bf16.mxu0 %v1061
    %1441 = vmatpush1.bf16.msra.mxu0 %v1060
    %1442 = vmatprep.subr.bf16.mxu0 %v1065
    %1443 = vmatpush1.bf16.msra.mxu0 %v1064
    %1444 = vmatprep.subr.bf16.mxu0 %v1069
    %1445 = vmatpush1.bf16.msra.mxu0 %v1068
    %1446 = vmatprep.subr.bf16.mxu0 %v1073
    %1447 = vmatpush1.bf16.msra.mxu0 %v1072
    %1448 = vmatprep.subr.bf16.mxu0 %v1077
    %1449 = vmatpush1.bf16.msra.mxu0 %v1076
    %1450 = vmatprep.subr.bf16.mxu0 %v1081
    %1451 = vmatpush1.bf16.msra.mxu0 %v1080
    %1452 = vmatprep.subr.bf16.mxu0 %v1085
    %1453 = vmatpush1.bf16.msra.mxu0 %v1084
    %1454 = vmatprep.subr.bf16.mxu0 %v1089
    %1455 = vmatpush1.bf16.msra.mxu0 %v1088
    %1456 = vmatprep.mubr.bf16.mxu0 %v216
    %1457 = vmatmul.mubr.bf16.gmra.mrb[0].mxu0 %v215
    %v1458 = vpop.f32.mrb[0].mxu0
    %v1459 = vadd.f32 %v423, %v1458
    %v1460 = vpop.f32.mrb[0].mxu0
    %v1461 = vadd.f32 %v427, %v1460
    %v1462 = vpop.f32.mrb[0].mxu0
    %v1463 = vadd.f32 %v423, %v1462
    %v1464 = vpop.f32.mrb[0].mxu0
    %v1465 = vadd.f32 %v427, %v1464
    %1466 = vdwg.mxu0
    %1467 = vmatprep.subr.bf16.mxu0 %v1093
    %1468 = vmatpush1.bf16.msra.mxu0 %v1092
    %1469 = vmatprep.subr.bf16.mxu0 %v1097
    %1470 = vmatpush1.bf16.msra.mxu0 %v1096
    %1471 = vmatprep.subr.bf16.mxu0 %v1101
    %1472 = vmatpush1.bf16.msra.mxu0 %v1100
    %1473 = vmatprep.subr.bf16.mxu0 %v1105
    %1474 = vmatpush1.bf16.msra.mxu0 %v1104
    %1475 = vmatprep.subr.bf16.mxu0 %v1109
    %1476 = vmatpush1.bf16.msra.mxu0 %v1108
    %1477 = vmatprep.subr.bf16.mxu0 %v1113
    %1478 = vmatpush1.bf16.msra.mxu0 %v1112
    %1479 = vmatprep.subr.bf16.mxu0 %v1117
    %1480 = vmatpush1.bf16.msra.mxu0 %v1116
    %1481 = vmatprep.subr.bf16.mxu0 %v1121
    %1482 = vmatpush1.bf16.msra.mxu0 %v1120
    %1483 = vmatprep.subr.bf16.mxu0 %v1125
    %1484 = vmatpush1.bf16.msra.mxu0 %v1124
    %1485 = vmatprep.subr.bf16.mxu0 %v1129
    %1486 = vmatpush1.bf16.msra.mxu0 %v1128
    %1487 = vmatprep.subr.bf16.mxu0 %v1133
    %1488 = vmatpush1.bf16.msra.mxu0 %v1132
    %1489 = vmatprep.subr.bf16.mxu0 %v1137
    %1490 = vmatpush1.bf16.msra.mxu0 %v1136
    %1491 = vmatprep.subr.bf16.mxu0 %v1141
    %1492 = vmatpush1.bf16.msra.mxu0 %v1140
    %1493 = vmatprep.subr.bf16.mxu0 %v1145
    %1494 = vmatpush1.bf16.msra.mxu0 %v1144
    %1495 = vmatprep.subr.bf16.mxu0 %v1149
    %1496 = vmatpush1.bf16.msra.mxu0 %v1148
    %1497 = vmatprep.subr.bf16.mxu0 %v1153
    %1498 = vmatpush1.bf16.msra.mxu0 %v1152
    %1499 = vmatprep.mubr.bf16.mxu0 %v218
    %1500 = vmatmul.mubr.bf16.gmra.mrb[0].mxu0 %v217
    %v1501 = vpop.f32.mrb[0].mxu0
    %v1502 = vadd.f32 %v1459, %v1501
    %v1503 = vpop.f32.mrb[0].mxu0
    %v1504 = vadd.f32 %v1461, %v1503
    %v1505 = vpop.f32.mrb[0].mxu0
    %v1506 = vadd.f32 %v1463, %v1505
    %v1507 = vpop.f32.mrb[0].mxu0
    %v1508 = vadd.f32 %v1465, %v1507
    %1509 = vdwg.mxu0
    %1510 = vmatprep.subr.bf16.mxu0 %v1157
    %1511 = vmatpush1.bf16.msra.mxu0 %v1156
    %1512 = vmatprep.subr.bf16.mxu0 %v1161
    %1513 = vmatpush1.bf16.msra.mxu0 %v1160
    %1514 = vmatprep.subr.bf16.mxu0 %v1165
    %1515 = vmatpush1.bf16.msra.mxu0 %v1164
    %1516 = vmatprep.subr.bf16.mxu0 %v1169
    %1517 = vmatpush1.bf16.msra.mxu0 %v1168
    %1518 = vmatprep.subr.bf16.mxu0 %v1173
    %1519 = vmatpush1.bf16.msra.mxu0 %v1172
    %1520 = vmatprep.subr.bf16.mxu0 %v1177
    %1521 = vmatpush1.bf16.msra.mxu0 %v1176
    %1522 = vmatprep.subr.bf16.mxu0 %v1181
    %1523 = vmatpush1.bf16.msra.mxu0 %v1180
    %1524 = vmatprep.subr.bf16.mxu0 %v1185
    %1525 = vmatpush1.bf16.msra.mxu0 %v1184
    %1526 = vmatprep.subr.bf16.mxu0 %v1189
    %1527 = vmatpush1.bf16.msra.mxu0 %v1188
    %1528 = vmatprep.subr.bf16.mxu0 %v1193
    %1529 = vmatpush1.bf16.msra.mxu0 %v1192
    %1530 = vmatprep.subr.bf16.mxu0 %v1197
    %1531 = vmatpush1.bf16.msra.mxu0 %v1196
    %1532 = vmatprep.subr.bf16.mxu0 %v1201
    %1533 = vmatpush1.bf16.msra.mxu0 %v1200
    %1534 = vmatprep.subr.bf16.mxu0 %v1205
    %1535 = vmatpush1.bf16.msra.mxu0 %v1204
    %1536 = vmatprep.subr.bf16.mxu0 %v1209
    %1537 = vmatpush1.bf16.msra.mxu0 %v1208
    %1538 = vmatprep.subr.bf16.mxu0 %v1213
    %1539 = vmatpush1.bf16.msra.mxu0 %v1212
    %1540 = vmatprep.subr.bf16.mxu0 %v1217
    %1541 = vmatpush1.bf16.msra.mxu0 %v1216
    %1542 = vmatprep.mubr.bf16.mxu0 %v220
    %1543 = vmatmul.mubr.bf16.gmra.mrb[0].mxu0 %v219
    %v1544 = vpop.f32.mrb[0].mxu0
    %v1545 = vadd.f32 %v1502, %v1544
    %v1546 = vpop.f32.mrb[0].mxu0
    %v1547 = vadd.f32 %v1504, %v1546
    %v1548 = vpop.f32.mrb[0].mxu0
    %v1549 = vadd.f32 %v1506, %v1548
    %v1550 = vpop.f32.mrb[0].mxu0
    %v1551 = vadd.f32 %v1508, %v1550
    %1552 = vdwg.mxu0
    %1553 = vmatprep.subr.bf16.mxu0 %v1221
    %1554 = vmatpush1.bf16.msra.mxu0 %v1220
    %1555 = vmatprep.subr.bf16.mxu0 0
    %1556 = vmatpush1.bf16.msra.mxu0 0
    %1557 = vmatprep.subr.bf16.mxu0 0
    %1558 = vmatpush1.bf16.msra.mxu0 0
    %1559 = vmatprep.subr.bf16.mxu0 0
    %1560 = vmatpush1.bf16.msra.mxu0 0
    %1561 = vmatprep.subr.bf16.mxu0 0
    %1562 = vmatpush1.bf16.msra.mxu0 0
    %1563 = vmatprep.subr.bf16.mxu0 0
    %1564 = vmatpush1.bf16.msra.mxu0 0
    %1565 = vmatprep.subr.bf16.mxu0 0
    %1566 = vmatpush1.bf16.msra.mxu0 0
    %1567 = vmatprep.subr.bf16.mxu0 0
    %1568 = vmatpush1.bf16.msra.mxu0 0
    %1569 = vmatprep.subr.bf16.mxu0 0
    %1570 = vmatpush1.bf16.msra.mxu0 0
    %1571 = vmatprep.subr.bf16.mxu0 0
    %1572 = vmatpush1.bf16.msra.mxu0 0
    %1573 = vmatprep.subr.bf16.mxu0 0
    %1574 = vmatpush1.bf16.msra.mxu0 0
    %1575 = vmatprep.subr.bf16.mxu0 0
    %1576 = vmatpush1.bf16.msra.mxu0 0
    %1577 = vmatprep.subr.bf16.mxu0 0
    %1578 = vmatpush1.bf16.msra.mxu0 0
    %1579 = vmatprep.subr.bf16.mxu0 0
    %1580 = vmatpush1.bf16.msra.mxu0 0
    %1581 = vmatprep.subr.bf16.mxu0 0
    %1582 = vmatpush1.bf16.msra.mxu0 0
    %1583 = vmatprep.subr.bf16.mxu0 0
    %1584 = vmatpush1.bf16.msra.mxu0 0
    %1585 = vmatprep.mubr.bf16.mxu0 0
    %1586 = vmatmul.mubr.bf16.gmra.mrb[0].mxu0 %v1422
    %v1587 = vpop.f32.mrb[0].mxu0
    %v1588 = vadd.f32 %v1545, %v1587
    %v1589 = vpop.f32.mrb[0].mxu0
    %v1590 = vadd.f32 %v1547, %v1589
    %v1591 = vpop.f32.mrb[0].mxu0
    %v1592 = vadd.f32 %v1549, %v1591
    %v1593 = vpop.f32.mrb[0].mxu0
    %v1594 = vadd.f32 %v1551, %v1593
    %1595 = vdwg.mxu0
    %1596 = vmatprep.subr.bf16.mxu0 %v1031
    %1597 = vmatpush1.bf16.msra.mxu0 %v1030
    %1598 = vmatprep.subr.bf16.mxu0 %v1035
    %1599 = vmatpush1.bf16.msra.mxu0 %v1034
    %1600 = vmatprep.subr.bf16.mxu0 %v1039
    %1601 = vmatpush1.bf16.msra.mxu0 %v1038
    %1602 = vmatprep.subr.bf16.mxu0 %v1043
    %1603 = vmatpush1.bf16.msra.mxu0 %v1042
    %1604 = vmatprep.subr.bf16.mxu0 %v1047
    %1605 = vmatpush1.bf16.msra.mxu0 %v1046
    %1606 = vmatprep.subr.bf16.mxu0 %v1051
    %1607 = vmatpush1.bf16.msra.mxu0 %v1050
    %1608 = vmatprep.subr.bf16.mxu0 %v1055
    %1609 = vmatpush1.bf16.msra.mxu0 %v1054
    %1610 = vmatprep.subr.bf16.mxu0 %v1059
    %1611 = vmatpush1.bf16.msra.mxu0 %v1058
    %1612 = vmatprep.subr.bf16.mxu0 %v1063
    %1613 = vmatpush1.bf16.msra.mxu0 %v1062
    %1614 = vmatprep.subr.bf16.mxu0 %v1067
    %1615 = vmatpush1.bf16.msra.mxu0 %v1066
    %1616 = vmatprep.subr.bf16.mxu0 %v1071
    %1617 = vmatpush1.bf16.msra.mxu0 %v1070
    %1618 = vmatprep.subr.bf16.mxu0 %v1075
    %1619 = vmatpush1.bf16.msra.mxu0 %v1074
    %1620 = vmatprep.subr.bf16.mxu0 %v1079
    %1621 = vmatpush1.bf16.msra.mxu0 %v1078
    %1622 = vmatprep.subr.bf16.mxu0 %v1083
    %1623 = vmatpush1.bf16.msra.mxu0 %v1082
    %1624 = vmatprep.subr.bf16.mxu0 %v1087
    %1625 = vmatpush1.bf16.msra.mxu0 %v1086
    %1626 = vmatprep.subr.bf16.mxu0 %v1091
    %1627 = vmatpush1.bf16.msra.mxu0 %v1090
    %1628 = vmatprep.mubr.bf16.mxu0 %v216
    %1629 = vmatmul.mubr.bf16.gmra.mrb[0].mxu0 %v215
    %v1630 = vpop.f32.mrb[0].mxu0
    %v1631 = vadd.f32 %v431, %v1630
    %v1632 = vpop.f32.mrb[0].mxu0
    %v1633 = vadd.f32 %v435, %v1632
    %v1634 = vpop.f32.mrb[0].mxu0
    %v1635 = vadd.f32 %v431, %v1634
    %v1636 = vpop.f32.mrb[0].mxu0
    %v1637 = vadd.f32 %v435, %v1636
    %1638 = vdwg.mxu0
    %1639 = vmatprep.subr.bf16.mxu0 %v1095
    %1640 = vmatpush1.bf16.msra.mxu0 %v1094
    %1641 = vmatprep.subr.bf16.mxu0 %v1099
    %1642 = vmatpush1.bf16.msra.mxu0 %v1098
    %1643 = vmatprep.subr.bf16.mxu0 %v1103
    %1644 = vmatpush1.bf16.msra.mxu0 %v1102
    %1645 = vmatprep.subr.bf16.mxu0 %v1107
    %1646 = vmatpush1.bf16.msra.mxu0 %v1106
    %1647 = vmatprep.subr.bf16.mxu0 %v1111
    %1648 = vmatpush1.bf16.msra.mxu0 %v1110
    %1649 = vmatprep.subr.bf16.mxu0 %v1115
    %1650 = vmatpush1.bf16.msra.mxu0 %v1114
    %1651 = vmatprep.subr.bf16.mxu0 %v1119
    %1652 = vmatpush1.bf16.msra.mxu0 %v1118
    %1653 = vmatprep.subr.bf16.mxu0 %v1123
    %1654 = vmatpush1.bf16.msra.mxu0 %v1122
    %1655 = vmatprep.subr.bf16.mxu0 %v1127
    %1656 = vmatpush1.bf16.msra.mxu0 %v1126
    %1657 = vmatprep.subr.bf16.mxu0 %v1131
    %1658 = vmatpush1.bf16.msra.mxu0 %v1130
    %1659 = vmatprep.subr.bf16.mxu0 %v1135
    %1660 = vmatpush1.bf16.msra.mxu0 %v1134
    %1661 = vmatprep.subr.bf16.mxu0 %v1139
    %1662 = vmatpush1.bf16.msra.mxu0 %v1138
    %1663 = vmatprep.subr.bf16.mxu0 %v1143
    %1664 = vmatpush1.bf16.msra.mxu0 %v1142
    %1665 = vmatprep.subr.bf16.mxu0 %v1147
    %1666 = vmatpush1.bf16.msra.mxu0 %v1146
    %1667 = vmatprep.subr.bf16.mxu0 %v1151
    %1668 = vmatpush1.bf16.msra.mxu0 %v1150
    %1669 = vmatprep.subr.bf16.mxu0 %v1155
    %1670 = vmatpush1.bf16.msra.mxu0 %v1154
    %1671 = vmatprep.mubr.bf16.mxu0 %v218
    %1672 = vmatmul.mubr.bf16.gmra.mrb[0].mxu0 %v217
    %v1673 = vpop.f32.mrb[0].mxu0
    %v1674 = vadd.f32 %v1631, %v1673
    %v1675 = vpop.f32.mrb[0].mxu0
    %v1676 = vadd.f32 %v1633, %v1675
    %v1677 = vpop.f32.mrb[0].mxu0
    %v1678 = vadd.f32 %v1635, %v1677
    %v1679 = vpop.f32.mrb[0].mxu0
    %v1680 = vadd.f32 %v1637, %v1679
    %1681 = vdwg.mxu0
    %1682 = vmatprep.subr.bf16.mxu0 %v1159
    %1683 = vmatpush1.bf16.msra.mxu0 %v1158
    %1684 = vmatprep.subr.bf16.mxu0 %v1163
    %1685 = vmatpush1.bf16.msra.mxu0 %v1162
    %1686 = vmatprep.subr.bf16.mxu0 %v1167
    %1687 = vmatpush1.bf16.msra.mxu0 %v1166
    %1688 = vmatprep.subr.bf16.mxu0 %v1171
    %1689 = vmatpush1.bf16.msra.mxu0 %v1170
    %1690 = vmatprep.subr.bf16.mxu0 %v1175
    %1691 = vmatpush1.bf16.msra.mxu0 %v1174
    %1692 = vmatprep.subr.bf16.mxu0 %v1179
    %1693 = vmatpush1.bf16.msra.mxu0 %v1178
    %1694 = vmatprep.subr.bf16.mxu0 %v1183
    %1695 = vmatpush1.bf16.msra.mxu0 %v1182
    %1696 = vmatprep.subr.bf16.mxu0 %v1187
    %1697 = vmatpush1.bf16.msra.mxu0 %v1186
    %1698 = vmatprep.subr.bf16.mxu0 %v1191
    %1699 = vmatpush1.bf16.msra.mxu0 %v1190
    %1700 = vmatprep.subr.bf16.mxu0 %v1195
    %1701 = vmatpush1.bf16.msra.mxu0 %v1194
    %1702 = vmatprep.subr.bf16.mxu0 %v1199
    %1703 = vmatpush1.bf16.msra.mxu0 %v1198
    %1704 = vmatprep.subr.bf16.mxu0 %v1203
    %1705 = vmatpush1.bf16.msra.mxu0 %v1202
    %1706 = vmatprep.subr.bf16.mxu0 %v1207
    %1707 = vmatpush1.bf16.msra.mxu0 %v1206
    %1708 = vmatprep.subr.bf16.mxu0 %v1211
    %1709 = vmatpush1.bf16.msra.mxu0 %v1210
    %1710 = vmatprep.subr.bf16.mxu0 %v1215
    %1711 = vmatpush1.bf16.msra.mxu0 %v1214
    %1712 = vmatprep.subr.bf16.mxu0 %v1219
    %1713 = vmatpush1.bf16.msra.mxu0 %v1218
    %1714 = vmatprep.mubr.bf16.mxu0 %v220
    %1715 = vmatmul.mubr.bf16.gmra.mrb[0].mxu0 %v219
    %v1716 = vpop.f32.mrb[0].mxu0
    %v1717 = vadd.f32 %v1674, %v1716
    %v1718 = vpop.f32.mrb[0].mxu0
    %v1719 = vadd.f32 %v1676, %v1718
    %v1720 = vpop.f32.mrb[0].mxu0
    %v1721 = vadd.f32 %v1678, %v1720
    %v1722 = vpop.f32.mrb[0].mxu0
    %v1723 = vadd.f32 %v1680, %v1722
    %1724 = vdwg.mxu0
    %1725 = vmatprep.subr.bf16.mxu0 %v1223
    %1726 = vmatpush1.bf16.msra.mxu0 %v1222
    %1727 = vmatprep.subr.bf16.mxu0 0
    %1728 = vmatpush1.bf16.msra.mxu0 0
    %1729 = vmatprep.subr.bf16.mxu0 0
    %1730 = vmatpush1.bf16.msra.mxu0 0
    %1731 = vmatprep.subr.bf16.mxu0 0
    %1732 = vmatpush1.bf16.msra.mxu0 0
    %1733 = vmatprep.subr.bf16.mxu0 0
    %1734 = vmatpush1.bf16.msra.mxu0 0
    %1735 = vmatprep.subr.bf16.mxu0 0
    %1736 = vmatpush1.bf16.msra.mxu0 0
    %1737 = vmatprep.subr.bf16.mxu0 0
    %1738 = vmatpush1.bf16.msra.mxu0 0
    %1739 = vmatprep.subr.bf16.mxu0 0
    %1740 = vmatpush1.bf16.msra.mxu0 0
    %1741 = vmatprep.subr.bf16.mxu0 0
    %1742 = vmatpush1.bf16.msra.mxu0 0
    %1743 = vmatprep.subr.bf16.mxu0 0
    %1744 = vmatpush1.bf16.msra.mxu0 0
    %1745 = vmatprep.subr.bf16.mxu0 0
    %1746 = vmatpush1.bf16.msra.mxu0 0
    %1747 = vmatprep.subr.bf16.mxu0 0
    %1748 = vmatpush1.bf16.msra.mxu0 0
    %1749 = vmatprep.subr.bf16.mxu0 0
    %1750 = vmatpush1.bf16.msra.mxu0 0
    %1751 = vmatprep.subr.bf16.mxu0 0
    %1752 = vmatpush1.bf16.msra.mxu0 0
    %1753 = vmatprep.subr.bf16.mxu0 0
    %1754 = vmatpush1.bf16.msra.mxu0 0
    %1755 = vmatprep.subr.bf16.mxu0 0
    %1756 = vmatpush1.bf16.msra.mxu0 0
    %1757 = vmatprep.mubr.bf16.mxu0 0
    %1758 = vmatmul.mubr.bf16.gmra.mrb[0].mxu0 %v1422
    %v1759 = vpop.f32.mrb[0].mxu0
    %v1760 = vadd.f32 %v1717, %v1759
    %v1761 = vpop.f32.mrb[0].mxu0
    %v1762 = vadd.f32 %v1719, %v1761
    %v1763 = vpop.f32.mrb[0].mxu0
    %v1764 = vadd.f32 %v1721, %v1763
    %v1765 = vpop.f32.mrb[0].mxu0
    %v1766 = vadd.f32 %v1723, %v1765
    %1767 = vdwg.mxu0
    %v1768 = vmax.f32 %v1588, 0.0
    %v1769 = vmax.f32 %v1590, 0.0
    %v1770 = vmax.f32 %v1760, 0.0
    %v1771 = vmax.f32 %v1762, 0.0
    %v1772 = vmax.f32 %v1592, 0.0
    %v1773 = vmax.f32 %v1594, 0.0
    %v1774 = vmax.f32 %v1764, 0.0
    %v1775 = vmax.f32 %v1766, 0.0
    %v1776 = vpack.c.bf16 %v1772, %v1768
    %v1777 = vpack.c.bf16 %v1773, %v1769
    %v1778 = vpack.c.bf16 %v1774, %v1770
    %v1779 = vpack.c.bf16 %v1775, %v1771
    %v1780 = vld [vmem:[%s3] sm:$0xff]
    %v1781 = vld [vmem:[%s3 + $0x8] sm:$0xff]
    %v1782 = vld [vmem:[%s3 + $0x10] sm:$0xff]
    %v1783 = vld [vmem:[%s3 + $0x18] sm:$0xff]
    %v1784 = vld [vmem:[%s3 + $0x20] sm:$0xff]
    %v1785 = vld [vmem:[%s3 + $0x28] sm:$0xff]
    %v1786 = vld [vmem:[%s3 + $0x30] sm:$0xff]
    %v1787 = vld [vmem:[%s3 + $0x38] sm:$0xff]
    %v1788 = vld [vmem:[%s3 + $0x40] sm:$0xff]
    %v1789 = vld [vmem:[%s3 + $0x48] sm:$0xff]
    %v1790 = vld [vmem:[%s3 + $0x50] sm:$0xff]
    %v1791 = vld [vmem:[%s3 + $0x58] sm:$0xff]
    %v1792 = vld [vmem:[%s3 + $0x60] sm:$0xff]
    %v1793 = vld [vmem:[%s3 + $0x68] sm:$0xff]
    %v1794 = vld [vmem:[%s3 + $0x70] sm:$0xff]
    %v1795 = vld [vmem:[%s3 + $0x78] sm:$0xff]
    %v1796 = vld [vmem:[%s3 + $0x80] sm:$0xff]
    %v1797 = vld [vmem:[%s3 + $0x88] sm:$0xff]
    %v1798 = vld [vmem:[%s3 + $0x90] sm:$0xff]
    %v1799 = vld [vmem:[%s3 + $0x98] sm:$0xff]
    %v1800 = vld [vmem:[%s3 + $0xa0] sm:$0xff]
    %v1801 = vld [vmem:[%s3 + $0xa8] sm:$0xff]
    %v1802 = vld [vmem:[%s3 + $0xb0] sm:$0xff]
    %v1803 = vld [vmem:[%s3 + $0xb8] sm:$0xff]
    %v1804 = vld [vmem:[%s3 + $0xc0] sm:$0xff]
    %v1805 = vld [vmem:[%s3 + $0xc8] sm:$0xff]
    %v1806 = vld [vmem:[%s3 + $0xd0] sm:$0xff]
    %v1807 = vld [vmem:[%s3 + $0xd8] sm:$0xff]
    %v1808 = vld [vmem:[%s3 + $0xe0] sm:$0xff]
    %v1809 = vld [vmem:[%s3 + $0xe8] sm:$0xff]
    %v1810 = vld [vmem:[%s3 + $0xf0] sm:$0xff]
    %v1811 = vld [vmem:[%s3 + $0xf8] sm:$0xff]
    %v1812 = vld [vmem:[%s3 + $0x100] sm:$0xff]
    %v1813 = vld [vmem:[%s3 + $0x108] sm:$0xff]
    %v1814 = vld [vmem:[%s3 + $0x110] sm:$0xff]
    %v1815 = vld [vmem:[%s3 + $0x118] sm:$0xff]
    %v1816 = vld [vmem:[%s3 + $0x120] sm:$0xff]
    %v1817 = vld [vmem:[%s3 + $0x128] sm:$0xff]
    %v1818 = vld [vmem:[%s3 + $0x130] sm:$0xff]
    %v1819 = vld [vmem:[%s3 + $0x138] sm:$0xff]
    %v1820 = vld [vmem:[%s3 + $0x140] sm:$0xff]
    %v1821 = vld [vmem:[%s3 + $0x148] sm:$0xff]
    %v1822 = vld [vmem:[%s3 + $0x150] sm:$0xff]
    %v1823 = vld [vmem:[%s3 + $0x158] sm:$0xff]
    %v1824 = vld [vmem:[%s3 + $0x160] sm:$0xff]
    %v1825 = vld [vmem:[%s3 + $0x168] sm:$0xff]
    %v1826 = vld [vmem:[%s3 + $0x170] sm:$0xff]
    %v1827 = vld [vmem:[%s3 + $0x178] sm:$0xff]
    %v1828 = vld [vmem:[%s3 + $0x180] sm:$0xff]
    %v1829 = vld [vmem:[%s3 + $0x188] sm:$0xff]
    %v1830 = vld [vmem:[%s3 + $0x190] sm:$0xff]
    %v1831 = vld [vmem:[%s3 + $0x198] sm:$0xff]
    %v1832 = vld [vmem:[%s3 + $0x1a0] sm:$0xff]
    %v1833 = vld [vmem:[%s3 + $0x1a8] sm:$0xff]
    %v1834 = vld [vmem:[%s3 + $0x1b0] sm:$0xff]
    %v1835 = vld [vmem:[%s3 + $0x1b8] sm:$0xff]
    %v1836 = vld [vmem:[%s3 + $0x1c0] sm:$0xff]
    %v1837 = vld [vmem:[%s3 + $0x1c8] sm:$0xff]
    %v1838 = vld [vmem:[%s3 + $0x1d0] sm:$0xff]
    %v1839 = vld [vmem:[%s3 + $0x1d8] sm:$0xff]
    %v1840 = vld [vmem:[%s3 + $0x1e0] sm:$0xff]
    %v1841 = vld [vmem:[%s3 + $0x1e8] sm:$0xff]
    %v1842 = vld [vmem:[%s3 + $0x1f0] sm:$0xff]
    %v1843 = vld [vmem:[%s3 + $0x1f8] sm:$0xff]
    %v1844 = vld [vmem:[%s3 + $0x200] sm:$0xff]
    %v1845 = vld [vmem:[%s3 + $0x208] sm:$0xff]
    %v1846 = vld [vmem:[%s3 + $0x210] sm:$0xff]
    %v1847 = vld [vmem:[%s3 + $0x218] sm:$0xff]
    %v1848 = vld [vmem:[%s3 + $0x220] sm:$0xff]
    %v1849 = vld [vmem:[%s3 + $0x228] sm:$0xff]
    %v1850 = vld [vmem:[%s3 + $0x230] sm:$0xff]
    %v1851 = vld [vmem:[%s3 + $0x238] sm:$0xff]
    %v1852 = vld [vmem:[%s3 + $0x240] sm:$0xff]
    %v1853 = vld [vmem:[%s3 + $0x248] sm:$0xff]
    %v1854 = vld [vmem:[%s3 + $0x250] sm:$0xff]
    %v1855 = vld [vmem:[%s3 + $0x258] sm:$0xff]
    %v1856 = vld [vmem:[%s3 + $0x260] sm:$0xff]
    %v1857 = vld [vmem:[%s3 + $0x268] sm:$0xff]
    %v1858 = vld [vmem:[%s3 + $0x270] sm:$0xff]
    %v1859 = vld [vmem:[%s3 + $0x278] sm:$0xff]
    %v1860 = vld [vmem:[%s3 + $0x280] sm:$0xff]
    %v1861 = vld [vmem:[%s3 + $0x288] sm:$0xff]
    %v1862 = vld [vmem:[%s3 + $0x290] sm:$0xff]
    %v1863 = vld [vmem:[%s3 + $0x298] sm:$0xff]
    %v1864 = vld [vmem:[%s3 + $0x2a0] sm:$0xff]
    %v1865 = vld [vmem:[%s3 + $0x2a8] sm:$0xff]
    %v1866 = vld [vmem:[%s3 + $0x2b0] sm:$0xff]
    %v1867 = vld [vmem:[%s3 + $0x2b8] sm:$0xff]
    %v1868 = vld [vmem:[%s3 + $0x2c0] sm:$0xff]
    %v1869 = vld [vmem:[%s3 + $0x2c8] sm:$0xff]
    %v1870 = vld [vmem:[%s3 + $0x2d0] sm:$0xff]
    %v1871 = vld [vmem:[%s3 + $0x2d8] sm:$0xff]
    %v1872 = vld [vmem:[%s3 + $0x2e0] sm:$0xff]
    %v1873 = vld [vmem:[%s3 + $0x2e8] sm:$0xff]
    %v1874 = vld [vmem:[%s3 + $0x2f0] sm:$0xff]
    %v1875 = vld [vmem:[%s3 + $0x2f8] sm:$0xff]
    %v1876 = vld [vmem:[%s3 + $0x300] sm:$0xff]
    %v1877 = vld [vmem:[%s3 + $0x308] sm:$0xff]
    %v1878 = vld [vmem:[%s3 + $0x310] sm:$0xff]
    %v1879 = vld [vmem:[%s3 + $0x318] sm:$0xff]
    %v1880 = vld [vmem:[%s3 + $0x320] sm:$0xff]
    %v1881 = vld [vmem:[%s3 + $0x328] sm:$0xff]
    %v1882 = vld [vmem:[%s3 + $0x330] sm:$0xff]
    %v1883 = vld [vmem:[%s3 + $0x338] sm:$0xff]
    %v1884 = vld [vmem:[%s3 + $0x340] sm:$0xff]
    %v1885 = vld [vmem:[%s3 + $0x348] sm:$0xff]
    %v1886 = vld [vmem:[%s3 + $0x350] sm:$0xff]
    %v1887 = vld [vmem:[%s3 + $0x358] sm:$0xff]
    %v1888 = vld [vmem:[%s3 + $0x360] sm:$0xff]
    %v1889 = vld [vmem:[%s3 + $0x368] sm:$0xff]
    %v1890 = vld [vmem:[%s3 + $0x370] sm:$0xff]
    %v1891 = vld [vmem:[%s3 + $0x378] sm:$0xff]
    %v1892 = vld [vmem:[%s3 + $0x380] sm:$0xff]
    %v1893 = vld [vmem:[%s3 + $0x388] sm:$0xff]
    %v1894 = vld [vmem:[%s3 + $0x390] sm:$0xff]
    %v1895 = vld [vmem:[%s3 + $0x398] sm:$0xff]
    %v1896 = vld [vmem:[%s3 + $0x3a0] sm:$0xff]
    %v1897 = vld [vmem:[%s3 + $0x3a8] sm:$0xff]
    %v1898 = vld [vmem:[%s3 + $0x3b0] sm:$0xff]
    %v1899 = vld [vmem:[%s3 + $0x3b8] sm:$0xff]
    %v1900 = vld [vmem:[%s3 + $0x3c0] sm:$0xff]
    %v1901 = vld [vmem:[%s3 + $0x3c8] sm:$0xff]
    %v1902 = vld [vmem:[%s3 + $0x3d0] sm:$0xff]
    %v1903 = vld [vmem:[%s3 + $0x3d8] sm:$0xff]
    %v1904 = vld [vmem:[%s3 + $0x3e0] sm:$0xff]
    %v1905 = vld [vmem:[%s3 + $0x3e8] sm:$0xff]
    %v1906 = vld [vmem:[%s3 + $0x3f0] sm:$0xff]
    %v1907 = vld [vmem:[%s3 + $0x3f8] sm:$0xff]
    %v1908 = vld [vmem:[%s4] sm:$0xf]
    %v1910 = vlaneseq
    %v1911 = vshrl.u32 %v1910, 7
    %v1912 = vsub.s32 0, %v1911
    %v1913 = vrot.slane %v1908, %v1912
    %v1914 = vlaneseq
    %v1915 = vshrl.u32 %v1914, 7
    %v1916 = vsub.s32 1, %v1915
    %v1917 = vrot.slane %v1908, %v1916
    %v1918 = vlaneseq
    %v1919 = vshrl.u32 %v1918, 7
    %v1920 = vsub.s32 2, %v1919
    %v1921 = vrot.slane %v1908, %v1920
    %v1922 = vlaneseq
    %v1923 = vshrl.u32 %v1922, 7
    %v1924 = vsub.s32 3, %v1923
    %v1925 = vrot.slane %v1908, %v1924
    %v2058 = vunpack.c.l.b16 %v1780
    %v2059 = vunpack.c.h.b16 %v1780
    %v2060 = vunpack.c.l.b16 %v1781
    %v2061 = vunpack.c.h.b16 %v1781
    %v2062 = vunpack.c.l.b16 %v1782
    %v2063 = vunpack.c.h.b16 %v1782
    %v2064 = vunpack.c.l.b16 %v1783
    %v2065 = vunpack.c.h.b16 %v1783
    %v2066 = vunpack.c.l.b16 %v1784
    %v2067 = vunpack.c.h.b16 %v1784
    %v2068 = vunpack.c.l.b16 %v1785
    %v2069 = vunpack.c.h.b16 %v1785
    %v2070 = vunpack.c.l.b16 %v1786
    %v2071 = vunpack.c.h.b16 %v1786
    %v2072 = vunpack.c.l.b16 %v1787
    %v2073 = vunpack.c.h.b16 %v1787
    %v2074 = vunpack.c.l.b16 %v1788
    %v2075 = vunpack.c.h.b16 %v1788
    %v2076 = vunpack.c.l.b16 %v1789
    %v2077 = vunpack.c.h.b16 %v1789
    %v2078 = vunpack.c.l.b16 %v1790
    %v2079 = vunpack.c.h.b16 %v1790
    %v2080 = vunpack.c.l.b16 %v1791
    %v2081 = vunpack.c.h.b16 %v1791
    %v2082 = vunpack.c.l.b16 %v1792
    %v2083 = vunpack.c.h.b16 %v1792
    %v2084 = vunpack.c.l.b16 %v1793
    %v2085 = vunpack.c.h.b16 %v1793
    %v2086 = vunpack.c.l.b16 %v1794
    %v2087 = vunpack.c.h.b16 %v1794
    %v2088 = vunpack.c.l.b16 %v1795
    %v2089 = vunpack.c.h.b16 %v1795
    %v2090 = vunpack.c.l.b16 %v1796
    %v2091 = vunpack.c.h.b16 %v1796
    %v2092 = vunpack.c.l.b16 %v1797
    %v2093 = vunpack.c.h.b16 %v1797
    %v2094 = vunpack.c.l.b16 %v1798
    %v2095 = vunpack.c.h.b16 %v1798
    %v2096 = vunpack.c.l.b16 %v1799
    %v2097 = vunpack.c.h.b16 %v1799
    %v2098 = vunpack.c.l.b16 %v1800
    %v2099 = vunpack.c.h.b16 %v1800
    %v2100 = vunpack.c.l.b16 %v1801
    %v2101 = vunpack.c.h.b16 %v1801
    %v2102 = vunpack.c.l.b16 %v1802
    %v2103 = vunpack.c.h.b16 %v1802
    %v2104 = vunpack.c.l.b16 %v1803
    %v2105 = vunpack.c.h.b16 %v1803
    %v2106 = vunpack.c.l.b16 %v1804
    %v2107 = vunpack.c.h.b16 %v1804
    %v2108 = vunpack.c.l.b16 %v1805
    %v2109 = vunpack.c.h.b16 %v1805
    %v2110 = vunpack.c.l.b16 %v1806
    %v2111 = vunpack.c.h.b16 %v1806
    %v2112 = vunpack.c.l.b16 %v1807
    %v2113 = vunpack.c.h.b16 %v1807
    %v2114 = vunpack.c.l.b16 %v1808
    %v2115 = vunpack.c.h.b16 %v1808
    %v2116 = vunpack.c.l.b16 %v1809
    %v2117 = vunpack.c.h.b16 %v1809
    %v2118 = vunpack.c.l.b16 %v1810
    %v2119 = vunpack.c.h.b16 %v1810
    %v2120 = vunpack.c.l.b16 %v1811
    %v2121 = vunpack.c.h.b16 %v1811
    %v2122 = vunpack.c.l.b16 %v1812
    %v2123 = vunpack.c.h.b16 %v1812
    %v2124 = vunpack.c.l.b16 %v1813
    %v2125 = vunpack.c.h.b16 %v1813
    %v2126 = vunpack.c.l.b16 %v1814
    %v2127 = vunpack.c.h.b16 %v1814
    %v2128 = vunpack.c.l.b16 %v1815
    %v2129 = vunpack.c.h.b16 %v1815
    %v2130 = vunpack.c.l.b16 %v1816
    %v2131 = vunpack.c.h.b16 %v1816
    %v2132 = vunpack.c.l.b16 %v1817
    %v2133 = vunpack.c.h.b16 %v1817
    %v2134 = vunpack.c.l.b16 %v1818
    %v2135 = vunpack.c.h.b16 %v1818
    %v2136 = vunpack.c.l.b16 %v1819
    %v2137 = vunpack.c.h.b16 %v1819
    %v2138 = vunpack.c.l.b16 %v1820
    %v2139 = vunpack.c.h.b16 %v1820
    %v2140 = vunpack.c.l.b16 %v1821
    %v2141 = vunpack.c.h.b16 %v1821
    %v2142 = vunpack.c.l.b16 %v1822
    %v2143 = vunpack.c.h.b16 %v1822
    %v2144 = vunpack.c.l.b16 %v1823
    %v2145 = vunpack.c.h.b16 %v1823
    %v2146 = vunpack.c.l.b16 %v1824
    %v2147 = vunpack.c.h.b16 %v1824
    %v2148 = vunpack.c.l.b16 %v1825
    %v2149 = vunpack.c.h.b16 %v1825
    %v2150 = vunpack.c.l.b16 %v1826
    %v2151 = vunpack.c.h.b16 %v1826
    %v2152 = vunpack.c.l.b16 %v1827
    %v2153 = vunpack.c.h.b16 %v1827
    %v2154 = vunpack.c.l.b16 %v1828
    %v2155 = vunpack.c.h.b16 %v1828
    %v2156 = vunpack.c.l.b16 %v1829
    %v2157 = vunpack.c.h.b16 %v1829
    %v2158 = vunpack.c.l.b16 %v1830
    %v2159 = vunpack.c.h.b16 %v1830
    %v2160 = vunpack.c.l.b16 %v1831
    %v2161 = vunpack.c.h.b16 %v1831
    %v2162 = vunpack.c.l.b16 %v1832
    %v2163 = vunpack.c.h.b16 %v1832
    %v2164 = vunpack.c.l.b16 %v1833
    %v2165 = vunpack.c.h.b16 %v1833
    %v2166 = vunpack.c.l.b16 %v1834
    %v2167 = vunpack.c.h.b16 %v1834
    %v2168 = vunpack.c.l.b16 %v1835
    %v2169 = vunpack.c.h.b16 %v1835
    %v2170 = vunpack.c.l.b16 %v1836
    %v2171 = vunpack.c.h.b16 %v1836
    %v2172 = vunpack.c.l.b16 %v1837
    %v2173 = vunpack.c.h.b16 %v1837
    %v2174 = vunpack.c.l.b16 %v1838
    %v2175 = vunpack.c.h.b16 %v1838
    %v2176 = vunpack.c.l.b16 %v1839
    %v2177 = vunpack.c.h.b16 %v1839
    %v2178 = vunpack.c.l.b16 %v1840
    %v2179 = vunpack.c.h.b16 %v1840
    %v2180 = vunpack.c.l.b16 %v1841
    %v2181 = vunpack.c.h.b16 %v1841
    %v2182 = vunpack.c.l.b16 %v1842
    %v2183 = vunpack.c.h.b16 %v1842
    %v2184 = vunpack.c.l.b16 %v1843
    %v2185 = vunpack.c.h.b16 %v1843
    %v2186 = vunpack.c.l.b16 %v1844
    %v2187 = vunpack.c.h.b16 %v1844
    %v2188 = vunpack.c.l.b16 %v1845
    %v2189 = vunpack.c.h.b16 %v1845
    %v2190 = vunpack.c.l.b16 %v1846
    %v2191 = vunpack.c.h.b16 %v1846
    %v2192 = vunpack.c.l.b16 %v1847
    %v2193 = vunpack.c.h.b16 %v1847
    %v2194 = vunpack.c.l.b16 %v1848
    %v2195 = vunpack.c.h.b16 %v1848
    %v2196 = vunpack.c.l.b16 %v1849
    %v2197 = vunpack.c.h.b16 %v1849
    %v2198 = vunpack.c.l.b16 %v1850
    %v2199 = vunpack.c.h.b16 %v1850
    %v2200 = vunpack.c.l.b16 %v1851
    %v2201 = vunpack.c.h.b16 %v1851
    %v2202 = vunpack.c.l.b16 %v1852
    %v2203 = vunpack.c.h.b16 %v1852
    %v2204 = vunpack.c.l.b16 %v1853
    %v2205 = vunpack.c.h.b16 %v1853
    %v2206 = vunpack.c.l.b16 %v1854
    %v2207 = vunpack.c.h.b16 %v1854
    %v2208 = vunpack.c.l.b16 %v1855
    %v2209 = vunpack.c.h.b16 %v1855
    %v2210 = vunpack.c.l.b16 %v1856
    %v2211 = vunpack.c.h.b16 %v1856
    %v2212 = vunpack.c.l.b16 %v1857
    %v2213 = vunpack.c.h.b16 %v1857
    %v2214 = vunpack.c.l.b16 %v1858
    %v2215 = vunpack.c.h.b16 %v1858
    %v2216 = vunpack.c.l.b16 %v1859
    %v2217 = vunpack.c.h.b16 %v1859
    %v2218 = vunpack.c.l.b16 %v1860
    %v2219 = vunpack.c.h.b16 %v1860
    %v2220 = vunpack.c.l.b16 %v1861
    %v2221 = vunpack.c.h.b16 %v1861
    %v2222 = vunpack.c.l.b16 %v1862
    %v2223 = vunpack.c.h.b16 %v1862
    %v2224 = vunpack.c.l.b16 %v1863
    %v2225 = vunpack.c.h.b16 %v1863
    %v2226 = vunpack.c.l.b16 %v1864
    %v2227 = vunpack.c.h.b16 %v1864
    %v2228 = vunpack.c.l.b16 %v1865
    %v2229 = vunpack.c.h.b16 %v1865
    %v2230 = vunpack.c.l.b16 %v1866
    %v2231 = vunpack.c.h.b16 %v1866
    %v2232 = vunpack.c.l.b16 %v1867
    %v2233 = vunpack.c.h.b16 %v1867
    %v2234 = vunpack.c.l.b16 %v1868
    %v2235 = vunpack.c.h.b16 %v1868
    %v2236 = vunpack.c.l.b16 %v1869
    %v2237 = vunpack.c.h.b16 %v1869
    %v2238 = vunpack.c.l.b16 %v1870
    %v2239 = vunpack.c.h.b16 %v1870
    %v2240 = vunpack.c.l.b16 %v1871
    %v2241 = vunpack.c.h.b16 %v1871
    %v2242 = vunpack.c.l.b16 %v1872
    %v2243 = vunpack.c.h.b16 %v1872
    %v2244 = vunpack.c.l.b16 %v1873
    %v2245 = vunpack.c.h.b16 %v1873
    %v2246 = vunpack.c.l.b16 %v1874
    %v2247 = vunpack.c.h.b16 %v1874
    %v2248 = vunpack.c.l.b16 %v1875
    %v2249 = vunpack.c.h.b16 %v1875
    %v2250 = vunpack.c.l.b16 %v1876
    %v2251 = vunpack.c.h.b16 %v1876
    %v2252 = vunpack.c.l.b16 %v1877
    %v2253 = vunpack.c.h.b16 %v1877
    %v2254 = vunpack.c.l.b16 %v1878
    %v2255 = vunpack.c.h.b16 %v1878
    %v2256 = vunpack.c.l.b16 %v1879
    %v2257 = vunpack.c.h.b16 %v1879
    %v2258 = vunpack.c.l.b16 %v1880
    %v2259 = vunpack.c.h.b16 %v1880
    %v2260 = vunpack.c.l.b16 %v1881
    %v2261 = vunpack.c.h.b16 %v1881
    %v2262 = vunpack.c.l.b16 %v1882
    %v2263 = vunpack.c.h.b16 %v1882
    %v2264 = vunpack.c.l.b16 %v1883
    %v2265 = vunpack.c.h.b16 %v1883
    %v2266 = vunpack.c.l.b16 %v1884
    %v2267 = vunpack.c.h.b16 %v1884
    %v2268 = vunpack.c.l.b16 %v1885
    %v2269 = vunpack.c.h.b16 %v1885
    %v2270 = vunpack.c.l.b16 %v1886
    %v2271 = vunpack.c.h.b16 %v1886
    %v2272 = vunpack.c.l.b16 %v1887
    %v2273 = vunpack.c.h.b16 %v1887
    %v2274 = vunpack.c.l.b16 %v1888
    %v2275 = vunpack.c.h.b16 %v1888
    %v2276 = vunpack.c.l.b16 %v1889
    %v2277 = vunpack.c.h.b16 %v1889
    %v2278 = vunpack.c.l.b16 %v1890
    %v2279 = vunpack.c.h.b16 %v1890
    %v2280 = vunpack.c.l.b16 %v1891
    %v2281 = vunpack.c.h.b16 %v1891
    %v2282 = vunpack.c.l.b16 %v1892
    %v2283 = vunpack.c.h.b16 %v1892
    %v2284 = vunpack.c.l.b16 %v1893
    %v2285 = vunpack.c.h.b16 %v1893
    %v2286 = vunpack.c.l.b16 %v1894
    %v2287 = vunpack.c.h.b16 %v1894
    %v2288 = vunpack.c.l.b16 %v1895
    %v2289 = vunpack.c.h.b16 %v1895
    %v2290 = vunpack.c.l.b16 %v1896
    %v2291 = vunpack.c.h.b16 %v1896
    %v2292 = vunpack.c.l.b16 %v1897
    %v2293 = vunpack.c.h.b16 %v1897
    %v2294 = vunpack.c.l.b16 %v1898
    %v2295 = vunpack.c.h.b16 %v1898
    %v2296 = vunpack.c.l.b16 %v1899
    %v2297 = vunpack.c.h.b16 %v1899
    %v2298 = vunpack.c.l.b16 %v1900
    %v2299 = vunpack.c.h.b16 %v1900
    %v2300 = vunpack.c.l.b16 %v1901
    %v2301 = vunpack.c.h.b16 %v1901
    %v2302 = vunpack.c.l.b16 %v1902
    %v2303 = vunpack.c.h.b16 %v1902
    %v2304 = vunpack.c.l.b16 %v1903
    %v2305 = vunpack.c.h.b16 %v1903
    %v2306 = vunpack.c.l.b16 %v1904
    %v2307 = vunpack.c.h.b16 %v1904
    %v2308 = vunpack.c.l.b16 %v1905
    %v2309 = vunpack.c.h.b16 %v1905
    %v2310 = vunpack.c.l.b16 %v1906
    %v2311 = vunpack.c.h.b16 %v1906
    %v2312 = vunpack.c.l.b16 %v1907
    %v2313 = vunpack.c.h.b16 %v1907
    %v2314 = vpack.c.b16 %v2062, %v2058
    %v2315 = vpack.c.b16 %v2063, %v2059
    %v2316 = vpack.c.b16 %v2064, %v2060
    %v2317 = vpack.c.b16 %v2065, %v2061
    %v2318 = vpack.c.b16 %v2070, %v2066
    %v2319 = vpack.c.b16 %v2071, %v2067
    %v2320 = vpack.c.b16 %v2072, %v2068
    %v2321 = vpack.c.b16 %v2073, %v2069
    %v2322 = vpack.c.b16 %v2078, %v2074
    %v2323 = vpack.c.b16 %v2079, %v2075
    %v2324 = vpack.c.b16 %v2080, %v2076
    %v2325 = vpack.c.b16 %v2081, %v2077
    %v2326 = vpack.c.b16 %v2086, %v2082
    %v2327 = vpack.c.b16 %v2087, %v2083
    %v2328 = vpack.c.b16 %v2088, %v2084
    %v2329 = vpack.c.b16 %v2089, %v2085
    %v2330 = vpack.c.b16 %v2094, %v2090
    %v2331 = vpack.c.b16 %v2095, %v2091
    %v2332 = vpack.c.b16 %v2096, %v2092
    %v2333 = vpack.c.b16 %v2097, %v2093
    %v2334 = vpack.c.b16 %v2102, %v2098
    %v2335 = vpack.c.b16 %v2103, %v2099
    %v2336 = vpack.c.b16 %v2104, %v2100
    %v2337 = vpack.c.b16 %v2105, %v2101
    %v2338 = vpack.c.b16 %v2110, %v2106
    %v2339 = vpack.c.b16 %v2111, %v2107
    %v2340 = vpack.c.b16 %v2112, %v2108
    %v2341 = vpack.c.b16 %v2113, %v2109
    %v2342 = vpack.c.b16 %v2118, %v2114
    %v2343 = vpack.c.b16 %v2119, %v2115
    %v2344 = vpack.c.b16 %v2120, %v2116
    %v2345 = vpack.c.b16 %v2121, %v2117
    %v2346 = vpack.c.b16 %v2126, %v2122
    %v2347 = vpack.c.b16 %v2127, %v2123
    %v2348 = vpack.c.b16 %v2128, %v2124
    %v2349 = vpack.c.b16 %v2129, %v2125
    %v2350 = vpack.c.b16 %v2134, %v2130
    %v2351 = vpack.c.b16 %v2135, %v2131
    %v2352 = vpack.c.b16 %v2136, %v2132
    %v2353 = vpack.c.b16 %v2137, %v2133
    %v2354 = vpack.c.b16 %v2142, %v2138
    %v2355 = vpack.c.b16 %v2143, %v2139
    %v2356 = vpack.c.b16 %v2144, %v2140
    %v2357 = vpack.c.b16 %v2145, %v2141
    %v2358 = vpack.c.b16 %v2150, %v2146
    %v2359 = vpack.c.b16 %v2151, %v2147
    %v2360 = vpack.c.b16 %v2152, %v2148
    %v2361 = vpack.c.b16 %v2153, %v2149
    %v2362 = vpack.c.b16 %v2158, %v2154
    %v2363 = vpack.c.b16 %v2159, %v2155
    %v2364 = vpack.c.b16 %v2160, %v2156
    %v2365 = vpack.c.b16 %v2161, %v2157
    %v2366 = vpack.c.b16 %v2166, %v2162
    %v2367 = vpack.c.b16 %v2167, %v2163
    %v2368 = vpack.c.b16 %v2168, %v2164
    %v2369 = vpack.c.b16 %v2169, %v2165
    %v2370 = vpack.c.b16 %v2174, %v2170
    %v2371 = vpack.c.b16 %v2175, %v2171
    %v2372 = vpack.c.b16 %v2176, %v2172
    %v2373 = vpack.c.b16 %v2177, %v2173
    %v2374 = vpack.c.b16 %v2182, %v2178
    %v2375 = vpack.c.b16 %v2183, %v2179
    %v2376 = vpack.c.b16 %v2184, %v2180
    %v2377 = vpack.c.b16 %v2185, %v2181
    %v2378 = vpack.c.b16 %v2190, %v2186
    %v2379 = vpack.c.b16 %v2191, %v2187
    %v2380 = vpack.c.b16 %v2192, %v2188
    %v2381 = vpack.c.b16 %v2193, %v2189
    %v2382 = vpack.c.b16 %v2198, %v2194
    %v2383 = vpack.c.b16 %v2199, %v2195
    %v2384 = vpack.c.b16 %v2200, %v2196
    %v2385 = vpack.c.b16 %v2201, %v2197
    %v2386 = vpack.c.b16 %v2206, %v2202
    %v2387 = vpack.c.b16 %v2207, %v2203
    %v2388 = vpack.c.b16 %v2208, %v2204
    %v2389 = vpack.c.b16 %v2209, %v2205
    %v2390 = vpack.c.b16 %v2214, %v2210
    %v2391 = vpack.c.b16 %v2215, %v2211
    %v2392 = vpack.c.b16 %v2216, %v2212
    %v2393 = vpack.c.b16 %v2217, %v2213
    %v2394 = vpack.c.b16 %v2222, %v2218
    %v2395 = vpack.c.b16 %v2223, %v2219
    %v2396 = vpack.c.b16 %v2224, %v2220
    %v2397 = vpack.c.b16 %v2225, %v2221
    %v2398 = vpack.c.b16 %v2230, %v2226
    %v2399 = vpack.c.b16 %v2231, %v2227
    %v2400 = vpack.c.b16 %v2232, %v2228
    %v2401 = vpack.c.b16 %v2233, %v2229
    %v2402 = vpack.c.b16 %v2238, %v2234
    %v2403 = vpack.c.b16 %v2239, %v2235
    %v2404 = vpack.c.b16 %v2240, %v2236
    %v2405 = vpack.c.b16 %v2241, %v2237
    %v2406 = vpack.c.b16 %v2246, %v2242
    %v2407 = vpack.c.b16 %v2247, %v2243
    %v2408 = vpack.c.b16 %v2248, %v2244
    %v2409 = vpack.c.b16 %v2249, %v2245
    %v2410 = vpack.c.b16 %v2254, %v2250
    %v2411 = vpack.c.b16 %v2255, %v2251
    %v2412 = vpack.c.b16 %v2256, %v2252
    %v2413 = vpack.c.b16 %v2257, %v2253
    %v2414 = vpack.c.b16 %v2262, %v2258
    %v2415 = vpack.c.b16 %v2263, %v2259
    %v2416 = vpack.c.b16 %v2264, %v2260
    %v2417 = vpack.c.b16 %v2265, %v2261
    %v2418 = vpack.c.b16 %v2270, %v2266
    %v2419 = vpack.c.b16 %v2271, %v2267
    %v2420 = vpack.c.b16 %v2272, %v2268
    %v2421 = vpack.c.b16 %v2273, %v2269
    %v2422 = vpack.c.b16 %v2278, %v2274
    %v2423 = vpack.c.b16 %v2279, %v2275
    %v2424 = vpack.c.b16 %v2280, %v2276
    %v2425 = vpack.c.b16 %v2281, %v2277
    %v2426 = vpack.c.b16 %v2286, %v2282
    %v2427 = vpack.c.b16 %v2287, %v2283
    %v2428 = vpack.c.b16 %v2288, %v2284
    %v2429 = vpack.c.b16 %v2289, %v2285
    %v2430 = vpack.c.b16 %v2294, %v2290
    %v2431 = vpack.c.b16 %v2295, %v2291
    %v2432 = vpack.c.b16 %v2296, %v2292
    %v2433 = vpack.c.b16 %v2297, %v2293
    %v2434 = vpack.c.b16 %v2302, %v2298
    %v2435 = vpack.c.b16 %v2303, %v2299
    %v2436 = vpack.c.b16 %v2304, %v2300
    %v2437 = vpack.c.b16 %v2305, %v2301
    %v2438 = vpack.c.b16 %v2310, %v2306
    %v2439 = vpack.c.b16 %v2311, %v2307
    %v2440 = vpack.c.b16 %v2312, %v2308
    %v2441 = vpack.c.b16 %v2313, %v2309
    %2570 = vmatprep.subr.bf16.mxu0 %v2315
    %2571 = vmatpush1.bf16.msra.mxu0 %v2314
    %2572 = vmatprep.subr.bf16.mxu0 %v2319
    %2573 = vmatpush1.bf16.msra.mxu0 %v2318
    %2574 = vmatprep.subr.bf16.mxu0 %v2323
    %2575 = vmatpush1.bf16.msra.mxu0 %v2322
    %2576 = vmatprep.subr.bf16.mxu0 %v2327
    %2577 = vmatpush1.bf16.msra.mxu0 %v2326
    %2578 = vmatprep.subr.bf16.mxu0 %v2331
    %2579 = vmatpush1.bf16.msra.mxu0 %v2330
    %2580 = vmatprep.subr.bf16.mxu0 %v2335
    %2581 = vmatpush1.bf16.msra.mxu0 %v2334
    %2582 = vmatprep.subr.bf16.mxu0 %v2339
    %2583 = vmatpush1.bf16.msra.mxu0 %v2338
    %2584 = vmatprep.subr.bf16.mxu0 %v2343
    %2585 = vmatpush1.bf16.msra.mxu0 %v2342
    %2586 = vmatprep.subr.bf16.mxu0 %v2347
    %2587 = vmatpush1.bf16.msra.mxu0 %v2346
    %2588 = vmatprep.subr.bf16.mxu0 %v2351
    %2589 = vmatpush1.bf16.msra.mxu0 %v2350
    %2590 = vmatprep.subr.bf16.mxu0 %v2355
    %2591 = vmatpush1.bf16.msra.mxu0 %v2354
    %2592 = vmatprep.subr.bf16.mxu0 %v2359
    %2593 = vmatpush1.bf16.msra.mxu0 %v2358
    %2594 = vmatprep.subr.bf16.mxu0 %v2363
    %2595 = vmatpush1.bf16.msra.mxu0 %v2362
    %2596 = vmatprep.subr.bf16.mxu0 %v2367
    %2597 = vmatpush1.bf16.msra.mxu0 %v2366
    %2598 = vmatprep.subr.bf16.mxu0 %v2371
    %2599 = vmatpush1.bf16.msra.mxu0 %v2370
    %2600 = vmatprep.subr.bf16.mxu0 %v2375
    %2601 = vmatpush1.bf16.msra.mxu0 %v2374
    %2602 = vmatprep.mubr.bf16.mxu0 %v1777
    %2603 = vmatmul.mubr.bf16.gmra.mrb[0].mxu0 %v1776
    %v2604 = vpop.f32.mrb[0].mxu0
    %v2605 = vadd.f32 %v1913, %v2604
    %v2606 = vpop.f32.mrb[0].mxu0
    %v2607 = vadd.f32 %v1917, %v2606
    %v2608 = vpop.f32.mrb[0].mxu0
    %v2609 = vadd.f32 %v1913, %v2608
    %v2610 = vpop.f32.mrb[0].mxu0
    %v2611 = vadd.f32 %v1917, %v2610
    %2612 = vdwg.mxu0
    %2613 = vmatprep.subr.bf16.mxu0 %v2379
    %2614 = vmatpush1.bf16.msra.mxu0 %v2378
    %2615 = vmatprep.subr.bf16.mxu0 %v2383
    %2616 = vmatpush1.bf16.msra.mxu0 %v2382
    %2617 = vmatprep.subr.bf16.mxu0 %v2387
    %2618 = vmatpush1.bf16.msra.mxu0 %v2386
    %2619 = vmatprep.subr.bf16.mxu0 %v2391
    %2620 = vmatpush1.bf16.msra.mxu0 %v2390
    %2621 = vmatprep.subr.bf16.mxu0 %v2395
    %2622 = vmatpush1.bf16.msra.mxu0 %v2394
    %2623 = vmatprep.subr.bf16.mxu0 %v2399
    %2624 = vmatpush1.bf16.msra.mxu0 %v2398
    %2625 = vmatprep.subr.bf16.mxu0 %v2403
    %2626 = vmatpush1.bf16.msra.mxu0 %v2402
    %2627 = vmatprep.subr.bf16.mxu0 %v2407
    %2628 = vmatpush1.bf16.msra.mxu0 %v2406
    %2629 = vmatprep.subr.bf16.mxu0 %v2411
    %2630 = vmatpush1.bf16.msra.mxu0 %v2410
    %2631 = vmatprep.subr.bf16.mxu0 %v2415
    %2632 = vmatpush1.bf16.msra.mxu0 %v2414
    %2633 = vmatprep.subr.bf16.mxu0 %v2419
    %2634 = vmatpush1.bf16.msra.mxu0 %v2418
    %2635 = vmatprep.subr.bf16.mxu0 %v2423
    %2636 = vmatpush1.bf16.msra.mxu0 %v2422
    %2637 = vmatprep.subr.bf16.mxu0 %v2427
    %2638 = vmatpush1.bf16.msra.mxu0 %v2426
    %2639 = vmatprep.subr.bf16.mxu0 %v2431
    %2640 = vmatpush1.bf16.msra.mxu0 %v2430
    %2641 = vmatprep.subr.bf16.mxu0 %v2435
    %2642 = vmatpush1.bf16.msra.mxu0 %v2434
    %2643 = vmatprep.subr.bf16.mxu0 %v2439
    %2644 = vmatpush1.bf16.msra.mxu0 %v2438
    %2645 = vmatprep.mubr.bf16.mxu0 %v1779
    %2646 = vmatmul.mubr.bf16.gmra.mrb[0].mxu0 %v1778
    %v2647 = vpop.f32.mrb[0].mxu0
    %v2648 = vadd.f32 %v2605, %v2647
    %v2649 = vpop.f32.mrb[0].mxu0
    %v2650 = vadd.f32 %v2607, %v2649
    %v2651 = vpop.f32.mrb[0].mxu0
    %v2652 = vadd.f32 %v2609, %v2651
    %v2653 = vpop.f32.mrb[0].mxu0
    %v2654 = vadd.f32 %v2611, %v2653
    %2655 = vdwg.mxu0
    %2656 = vmatprep.subr.bf16.mxu0 %v2317
    %2657 = vmatpush1.bf16.msra.mxu0 %v2316
    %2658 = vmatprep.subr.bf16.mxu0 %v2321
    %2659 = vmatpush1.bf16.msra.mxu0 %v2320
    %2660 = vmatprep.subr.bf16.mxu0 %v2325
    %2661 = vmatpush1.bf16.msra.mxu0 %v2324
    %2662 = vmatprep.subr.bf16.mxu0 %v2329
    %2663 = vmatpush1.bf16.msra.mxu0 %v2328
    %2664 = vmatprep.subr.bf16.mxu0 %v2333
    %2665 = vmatpush1.bf16.msra.mxu0 %v2332
    %2666 = vmatprep.subr.bf16.mxu0 %v2337
    %2667 = vmatpush1.bf16.msra.mxu0 %v2336
    %2668 = vmatprep.subr.bf16.mxu0 %v2341
    %2669 = vmatpush1.bf16.msra.mxu0 %v2340
    %2670 = vmatprep.subr.bf16.mxu0 %v2345
    %2671 = vmatpush1.bf16.msra.mxu0 %v2344
    %2672 = vmatprep.subr.bf16.mxu0 %v2349
    %2673 = vmatpush1.bf16.msra.mxu0 %v2348
    %2674 = vmatprep.subr.bf16.mxu0 %v2353
    %2675 = vmatpush1.bf16.msra.mxu0 %v2352
    %2676 = vmatprep.subr.bf16.mxu0 %v2357
    %2677 = vmatpush1.bf16.msra.mxu0 %v2356
    %2678 = vmatprep.subr.bf16.mxu0 %v2361
    %2679 = vmatpush1.bf16.msra.mxu0 %v2360
    %2680 = vmatprep.subr.bf16.mxu0 %v2365
    %2681 = vmatpush1.bf16.msra.mxu0 %v2364
    %2682 = vmatprep.subr.bf16.mxu0 %v2369
    %2683 = vmatpush1.bf16.msra.mxu0 %v2368
    %2684 = vmatprep.subr.bf16.mxu0 %v2373
    %2685 = vmatpush1.bf16.msra.mxu0 %v2372
    %2686 = vmatprep.subr.bf16.mxu0 %v2377
    %2687 = vmatpush1.bf16.msra.mxu0 %v2376
    %2688 = vmatprep.mubr.bf16.mxu0 %v1777
    %2689 = vmatmul.mubr.bf16.gmra.mrb[0].mxu0 %v1776
    %v2690 = vpop.f32.mrb[0].mxu0
    %v2691 = vadd.f32 %v1921, %v2690
    %v2692 = vpop.f32.mrb[0].mxu0
    %v2693 = vadd.f32 %v1925, %v2692
    %v2694 = vpop.f32.mrb[0].mxu0
    %v2695 = vadd.f32 %v1921, %v2694
    %v2696 = vpop.f32.mrb[0].mxu0
    %v2697 = vadd.f32 %v1925, %v2696
    %2698 = vdwg.mxu0
    %2699 = vmatprep.subr.bf16.mxu0 %v2381
    %2700 = vmatpush1.bf16.msra.mxu0 %v2380
    %2701 = vmatprep.subr.bf16.mxu0 %v2385
    %2702 = vmatpush1.bf16.msra.mxu0 %v2384
    %2703 = vmatprep.subr.bf16.mxu0 %v2389
    %2704 = vmatpush1.bf16.msra.mxu0 %v2388
    %2705 = vmatprep.subr.bf16.mxu0 %v2393
    %2706 = vmatpush1.bf16.msra.mxu0 %v2392
    %2707 = vmatprep.subr.bf16.mxu0 %v2397
    %2708 = vmatpush1.bf16.msra.mxu0 %v2396
    %2709 = vmatprep.subr.bf16.mxu0 %v2401
    %2710 = vmatpush1.bf16.msra.mxu0 %v2400
    %2711 = vmatprep.subr.bf16.mxu0 %v2405
    %2712 = vmatpush1.bf16.msra.mxu0 %v2404
    %2713 = vmatprep.subr.bf16.mxu0 %v2409
    %2714 = vmatpush1.bf16.msra.mxu0 %v2408
    %2715 = vmatprep.subr.bf16.mxu0 %v2413
    %2716 = vmatpush1.bf16.msra.mxu0 %v2412
    %2717 = vmatprep.subr.bf16.mxu0 %v2417
    %2718 = vmatpush1.bf16.msra.mxu0 %v2416
    %2719 = vmatprep.subr.bf16.mxu0 %v2421
    %2720 = vmatpush1.bf16.msra.mxu0 %v2420
    %2721 = vmatprep.subr.bf16.mxu0 %v2425
    %2722 = vmatpush1.bf16.msra.mxu0 %v2424
    %2723 = vmatprep.subr.bf16.mxu0 %v2429
    %2724 = vmatpush1.bf16.msra.mxu0 %v2428
    %2725 = vmatprep.subr.bf16.mxu0 %v2433
    %2726 = vmatpush1.bf16.msra.mxu0 %v2432
    %2727 = vmatprep.subr.bf16.mxu0 %v2437
    %2728 = vmatpush1.bf16.msra.mxu0 %v2436
    %2729 = vmatprep.subr.bf16.mxu0 %v2441
    %2730 = vmatpush1.bf16.msra.mxu0 %v2440
    %2731 = vmatprep.mubr.bf16.mxu0 %v1779
    %2732 = vmatmul.mubr.bf16.gmra.mrb[0].mxu0 %v1778
    %v2733 = vpop.f32.mrb[0].mxu0
    %v2734 = vadd.f32 %v2691, %v2733
    %v2735 = vpop.f32.mrb[0].mxu0
    %v2736 = vadd.f32 %v2693, %v2735
    %v2737 = vpop.f32.mrb[0].mxu0
    %v2738 = vadd.f32 %v2695, %v2737
    %v2739 = vpop.f32.mrb[0].mxu0
    %v2740 = vadd.f32 %v2697, %v2739
    %2741 = vdwg.mxu0
    %v2742 = vmax.f32 %v2648, 0.0
    %v2743 = vmax.f32 %v2650, 0.0
    %v2744 = vmax.f32 %v2734, 0.0
    %v2745 = vmax.f32 %v2736, 0.0
    %v2746 = vmax.f32 %v2652, 0.0
    %v2747 = vmax.f32 %v2654, 0.0
    %v2748 = vmax.f32 %v2738, 0.0
    %v2749 = vmax.f32 %v2740, 0.0
    %v2750 = vpack.c.bf16 %v2746, %v2742
    %v2751 = vpack.c.bf16 %v2747, %v2743
    %v2752 = vpack.c.bf16 %v2748, %v2744
    %v2753 = vpack.c.bf16 %v2749, %v2745
    %v2754 = vld [vmem:[%s5] sm:$0xf]
    %v2755 = vld [vmem:[%s5 + $0x4] sm:$0xf]
    %v2756 = vld [vmem:[%s5 + $0x8] sm:$0xf]
    %v2757 = vld [vmem:[%s5 + $0xc] sm:$0xf]
    %v2758 = vld [vmem:[%s5 + $0x10] sm:$0xf]
    %v2759 = vld [vmem:[%s5 + $0x14] sm:$0xf]
    %v2760 = vld [vmem:[%s5 + $0x18] sm:$0xf]
    %v2761 = vld [vmem:[%s5 + $0x1c] sm:$0xf]
    %v2762 = vld [vmem:[%s5 + $0x20] sm:$0xf]
    %v2763 = vld [vmem:[%s5 + $0x24] sm:$0xf]
    %v2764 = vld [vmem:[%s5 + $0x28] sm:$0xf]
    %v2765 = vld [vmem:[%s5 + $0x2c] sm:$0xf]
    %v2766 = vld [vmem:[%s5 + $0x30] sm:$0xf]
    %v2767 = vld [vmem:[%s5 + $0x34] sm:$0xf]
    %v2768 = vld [vmem:[%s5 + $0x38] sm:$0xf]
    %v2769 = vld [vmem:[%s5 + $0x3c] sm:$0xf]
    %v2770 = vld [vmem:[%s5 + $0x40] sm:$0xf]
    %v2771 = vld [vmem:[%s5 + $0x44] sm:$0xf]
    %v2772 = vld [vmem:[%s5 + $0x48] sm:$0xf]
    %v2773 = vld [vmem:[%s5 + $0x4c] sm:$0xf]
    %v2774 = vld [vmem:[%s5 + $0x50] sm:$0xf]
    %v2775 = vld [vmem:[%s5 + $0x54] sm:$0xf]
    %v2776 = vld [vmem:[%s5 + $0x58] sm:$0xf]
    %v2777 = vld [vmem:[%s5 + $0x5c] sm:$0xf]
    %v2778 = vld [vmem:[%s5 + $0x60] sm:$0xf]
    %v2779 = vld [vmem:[%s5 + $0x64] sm:$0xf]
    %v2780 = vld [vmem:[%s5 + $0x68] sm:$0xf]
    %v2781 = vld [vmem:[%s5 + $0x6c] sm:$0xf]
    %v2782 = vld [vmem:[%s5 + $0x70] sm:$0xf]
    %v2783 = vld [vmem:[%s5 + $0x74] sm:$0xf]
    %v2784 = vld [vmem:[%s5 + $0x78] sm:$0xf]
    %v2785 = vld [vmem:[%s5 + $0x7c] sm:$0xf]
    %v2786 = vld [vmem:[%s5 + $0x80] sm:$0xf]
    %v2787 = vld [vmem:[%s5 + $0x84] sm:$0xf]
    %v2788 = vld [vmem:[%s5 + $0x88] sm:$0xf]
    %v2789 = vld [vmem:[%s5 + $0x8c] sm:$0xf]
    %v2790 = vld [vmem:[%s5 + $0x90] sm:$0xf]
    %v2791 = vld [vmem:[%s5 + $0x94] sm:$0xf]
    %v2792 = vld [vmem:[%s5 + $0x98] sm:$0xf]
    %v2793 = vld [vmem:[%s5 + $0x9c] sm:$0xf]
    %v2794 = vld [vmem:[%s5 + $0xa0] sm:$0xf]
    %v2795 = vld [vmem:[%s5 + $0xa4] sm:$0xf]
    %v2796 = vld [vmem:[%s5 + $0xa8] sm:$0xf]
    %v2797 = vld [vmem:[%s5 + $0xac] sm:$0xf]
    %v2798 = vld [vmem:[%s5 + $0xb0] sm:$0xf]
    %v2799 = vld [vmem:[%s5 + $0xb4] sm:$0xf]
    %v2800 = vld [vmem:[%s5 + $0xb8] sm:$0xf]
    %v2801 = vld [vmem:[%s5 + $0xbc] sm:$0xf]
    %v2802 = vld [vmem:[%s5 + $0xc0] sm:$0xf]
    %v2803 = vld [vmem:[%s5 + $0xc4] sm:$0xf]
    %v2804 = vld [vmem:[%s5 + $0xc8] sm:$0xf]
    %v2805 = vld [vmem:[%s5 + $0xcc] sm:$0xf]
    %v2806 = vld [vmem:[%s5 + $0xd0] sm:$0xf]
    %v2807 = vld [vmem:[%s5 + $0xd4] sm:$0xf]
    %v2808 = vld [vmem:[%s5 + $0xd8] sm:$0xf]
    %v2809 = vld [vmem:[%s5 + $0xdc] sm:$0xf]
    %v2810 = vld [vmem:[%s5 + $0xe0] sm:$0xf]
    %v2811 = vld [vmem:[%s5 + $0xe4] sm:$0xf]
    %v2812 = vld [vmem:[%s5 + $0xe8] sm:$0xf]
    %v2813 = vld [vmem:[%s5 + $0xec] sm:$0xf]
    %v2814 = vld [vmem:[%s5 + $0xf0] sm:$0xf]
    %v2815 = vld [vmem:[%s5 + $0xf4] sm:$0xf]
    %v2816 = vld [vmem:[%s5 + $0xf8] sm:$0xf]
    %v2817 = vld [vmem:[%s5 + $0xfc] sm:$0xf]
    %v2818 = vld [vmem:[%s6] sm:$0x1]
    %v2820 = vlaneseq
    %v2821 = vshrl.u32 %v2820, 7
    %v2822 = vsub.s32 0, %v2821
    %v2823 = vrot.slane %v2818, %v2822
    %v2889 = vunpack.c.l.b16 %v2754
    %v2890 = vunpack.c.l.b16 %v2755
    %v2891 = vunpack.c.l.b16 %v2756
    %v2892 = vunpack.c.l.b16 %v2757
    %v2893 = vunpack.c.l.b16 %v2758
    %v2894 = vunpack.c.l.b16 %v2759
    %v2895 = vunpack.c.l.b16 %v2760
    %v2896 = vunpack.c.l.b16 %v2761
    %v2897 = vunpack.c.l.b16 %v2762
    %v2898 = vunpack.c.l.b16 %v2763
    %v2899 = vunpack.c.l.b16 %v2764
    %v2900 = vunpack.c.l.b16 %v2765
    %v2901 = vunpack.c.l.b16 %v2766
    %v2902 = vunpack.c.l.b16 %v2767
    %v2903 = vunpack.c.l.b16 %v2768
    %v2904 = vunpack.c.l.b16 %v2769
    %v2905 = vunpack.c.l.b16 %v2770
    %v2906 = vunpack.c.l.b16 %v2771
    %v2907 = vunpack.c.l.b16 %v2772
    %v2908 = vunpack.c.l.b16 %v2773
    %v2909 = vunpack.c.l.b16 %v2774
    %v2910 = vunpack.c.l.b16 %v2775
    %v2911 = vunpack.c.l.b16 %v2776
    %v2912 = vunpack.c.l.b16 %v2777
    %v2913 = vunpack.c.l.b16 %v2778
    %v2914 = vunpack.c.l.b16 %v2779
    %v2915 = vunpack.c.l.b16 %v2780
    %v2916 = vunpack.c.l.b16 %v2781
    %v2917 = vunpack.c.l.b16 %v2782
    %v2918 = vunpack.c.l.b16 %v2783
    %v2919 = vunpack.c.l.b16 %v2784
    %v2920 = vunpack.c.l.b16 %v2785
    %v2921 = vunpack.c.l.b16 %v2786
    %v2922 = vunpack.c.l.b16 %v2787
    %v2923 = vunpack.c.l.b16 %v2788
    %v2924 = vunpack.c.l.b16 %v2789
    %v2925 = vunpack.c.l.b16 %v2790
    %v2926 = vunpack.c.l.b16 %v2791
    %v2927 = vunpack.c.l.b16 %v2792
    %v2928 = vunpack.c.l.b16 %v2793
    %v2929 = vunpack.c.l.b16 %v2794
    %v2930 = vunpack.c.l.b16 %v2795
    %v2931 = vunpack.c.l.b16 %v2796
    %v2932 = vunpack.c.l.b16 %v2797
    %v2933 = vunpack.c.l.b16 %v2798
    %v2934 = vunpack.c.l.b16 %v2799
    %v2935 = vunpack.c.l.b16 %v2800
    %v2936 = vunpack.c.l.b16 %v2801
    %v2937 = vunpack.c.l.b16 %v2802
    %v2938 = vunpack.c.l.b16 %v2803
    %v2939 = vunpack.c.l.b16 %v2804
    %v2940 = vunpack.c.l.b16 %v2805
    %v2941 = vunpack.c.l.b16 %v2806
    %v2942 = vunpack.c.l.b16 %v2807
    %v2943 = vunpack.c.l.b16 %v2808
    %v2944 = vunpack.c.l.b16 %v2809
    %v2945 = vunpack.c.l.b16 %v2810
    %v2946 = vunpack.c.l.b16 %v2811
    %v2947 = vunpack.c.l.b16 %v2812
    %v2948 = vunpack.c.l.b16 %v2813
    %v2949 = vunpack.c.l.b16 %v2814
    %v2950 = vunpack.c.l.b16 %v2815
    %v2951 = vunpack.c.l.b16 %v2816
    %v2952 = vunpack.c.l.b16 %v2817
    %v2953 = vpack.c.b16 %v2890, %v2889
    %v2954 = vpack.c.b16 %v2892, %v2891
    %v2955 = vpack.c.b16 %v2894, %v2893
    %v2956 = vpack.c.b16 %v2896, %v2895
    %v2957 = vpack.c.b16 %v2898, %v2897
    %v2958 = vpack.c.b16 %v2900, %v2899
    %v2959 = vpack.c.b16 %v2902, %v2901
    %v2960 = vpack.c.b16 %v2904, %v2903
    %v2961 = vpack.c.b16 %v2906, %v2905
    %v2962 = vpack.c.b16 %v2908, %v2907
    %v2963 = vpack.c.b16 %v2910, %v2909
    %v2964 = vpack.c.b16 %v2912, %v2911
    %v2965 = vpack.c.b16 %v2914, %v2913
    %v2966 = vpack.c.b16 %v2916, %v2915
    %v2967 = vpack.c.b16 %v2918, %v2917
    %v2968 = vpack.c.b16 %v2920, %v2919
    %v2969 = vpack.c.b16 %v2922, %v2921
    %v2970 = vpack.c.b16 %v2924, %v2923
    %v2971 = vpack.c.b16 %v2926, %v2925
    %v2972 = vpack.c.b16 %v2928, %v2927
    %v2973 = vpack.c.b16 %v2930, %v2929
    %v2974 = vpack.c.b16 %v2932, %v2931
    %v2975 = vpack.c.b16 %v2934, %v2933
    %v2976 = vpack.c.b16 %v2936, %v2935
    %v2977 = vpack.c.b16 %v2938, %v2937
    %v2978 = vpack.c.b16 %v2940, %v2939
    %v2979 = vpack.c.b16 %v2942, %v2941
    %v2980 = vpack.c.b16 %v2944, %v2943
    %v2981 = vpack.c.b16 %v2946, %v2945
    %v2982 = vpack.c.b16 %v2948, %v2947
    %v2983 = vpack.c.b16 %v2950, %v2949
    %v2984 = vpack.c.b16 %v2952, %v2951
    %3017 = vmatprep.subr.bf16.mxu0 0
    %3018 = vmatpush1.bf16.msra.mxu0 %v2953
    %3019 = vmatprep.subr.bf16.mxu0 0
    %3020 = vmatpush1.bf16.msra.mxu0 %v2954
    %3021 = vmatprep.subr.bf16.mxu0 0
    %3022 = vmatpush1.bf16.msra.mxu0 %v2955
    %3023 = vmatprep.subr.bf16.mxu0 0
    %3024 = vmatpush1.bf16.msra.mxu0 %v2956
    %3025 = vmatprep.subr.bf16.mxu0 0
    %3026 = vmatpush1.bf16.msra.mxu0 %v2957
    %3027 = vmatprep.subr.bf16.mxu0 0
    %3028 = vmatpush1.bf16.msra.mxu0 %v2958
    %3029 = vmatprep.subr.bf16.mxu0 0
    %3030 = vmatpush1.bf16.msra.mxu0 %v2959
    %3031 = vmatprep.subr.bf16.mxu0 0
    %3032 = vmatpush1.bf16.msra.mxu0 %v2960
    %3033 = vmatprep.subr.bf16.mxu0 0
    %3034 = vmatpush1.bf16.msra.mxu0 %v2961
    %3035 = vmatprep.subr.bf16.mxu0 0
    %3036 = vmatpush1.bf16.msra.mxu0 %v2962
    %3037 = vmatprep.subr.bf16.mxu0 0
    %3038 = vmatpush1.bf16.msra.mxu0 %v2963
    %3039 = vmatprep.subr.bf16.mxu0 0
    %3040 = vmatpush1.bf16.msra.mxu0 %v2964
    %3041 = vmatprep.subr.bf16.mxu0 0
    %3042 = vmatpush1.bf16.msra.mxu0 %v2965
    %3043 = vmatprep.subr.bf16.mxu0 0
    %3044 = vmatpush1.bf16.msra.mxu0 %v2966
    %3045 = vmatprep.subr.bf16.mxu0 0
    %3046 = vmatpush1.bf16.msra.mxu0 %v2967
    %3047 = vmatprep.subr.bf16.mxu0 0
    %3048 = vmatpush1.bf16.msra.mxu0 %v2968
    %3049 = vmatprep.mubr.bf16.mxu0 %v2751
    %3050 = vmatmul.mubr.bf16.gmra.mrb[0].mxu0 %v2750
    %v3051 = vpop.f32.mrb[0].mxu0
    %v3052 = vadd.f32 %v2823, %v3051
    %v3053 = vpop.f32.mrb[0].mxu0
    %v3054 = vpop.f32.mrb[0].mxu0
    %v3055 = vadd.f32 %v2823, %v3054
    %v3056 = vpop.f32.mrb[0].mxu0
    %3057 = vdwg.mxu0
    %3058 = vmatprep.subr.bf16.mxu0 0
    %3059 = vmatpush1.bf16.msra.mxu0 %v2969
    %3060 = vmatprep.subr.bf16.mxu0 0
    %3061 = vmatpush1.bf16.msra.mxu0 %v2970
    %3062 = vmatprep.subr.bf16.mxu0 0
    %3063 = vmatpush1.bf16.msra.mxu0 %v2971
    %3064 = vmatprep.subr.bf16.mxu0 0
    %3065 = vmatpush1.bf16.msra.mxu0 %v2972
    %3066 = vmatprep.subr.bf16.mxu0 0
    %3067 = vmatpush1.bf16.msra.mxu0 %v2973
    %3068 = vmatprep.subr.bf16.mxu0 0
    %3069 = vmatpush1.bf16.msra.mxu0 %v2974
    %3070 = vmatprep.subr.bf16.mxu0 0
    %3071 = vmatpush1.bf16.msra.mxu0 %v2975
    %3072 = vmatprep.subr.bf16.mxu0 0
    %3073 = vmatpush1.bf16.msra.mxu0 %v2976
    %3074 = vmatprep.subr.bf16.mxu0 0
    %3075 = vmatpush1.bf16.msra.mxu0 %v2977
    %3076 = vmatprep.subr.bf16.mxu0 0
    %3077 = vmatpush1.bf16.msra.mxu0 %v2978
    %3078 = vmatprep.subr.bf16.mxu0 0
    %3079 = vmatpush1.bf16.msra.mxu0 %v2979
    %3080 = vmatprep.subr.bf16.mxu0 0
    %3081 = vmatpush1.bf16.msra.mxu0 %v2980
    %3082 = vmatprep.subr.bf16.mxu0 0
    %3083 = vmatpush1.bf16.msra.mxu0 %v2981
    %3084 = vmatprep.subr.bf16.mxu0 0
    %3085 = vmatpush1.bf16.msra.mxu0 %v2982
    %3086 = vmatprep.subr.bf16.mxu0 0
    %3087 = vmatpush1.bf16.msra.mxu0 %v2983
    %3088 = vmatprep.subr.bf16.mxu0 0
    %3089 = vmatpush1.bf16.msra.mxu0 %v2984
    %3090 = vmatprep.mubr.bf16.mxu0 %v2753
    %3091 = vmatmul.mubr.bf16.gmra.mrb[0].mxu0 %v2752
    %v3092 = vpop.f32.mrb[0].mxu0
    %v3093 = vadd.f32 %v3052, %v3092
    %v3094 = vpop.f32.mrb[0].mxu0
    %v3095 = vpop.f32.mrb[0].mxu0
    %v3096 = vadd.f32 %v3055, %v3095
    %v3097 = vpop.f32.mrb[0].mxu0
    %3098 = vdwg.mxu0
    %v3099 = vpack.c.bf16 %v3096, %v3093
    %v3101 = vcombine.high %v3099, %v3099
    %v3103 = vunpack.c.l.s4 1966171168
    %v3104 = vunpack.c.0.s8 %v3103
    %v3105 = vlaneseq
    %v3106 = vshrl.u32 %v3105, 7
    %v3107 = vsub.s32 %v3104, %v3106
    %v3108 = vrot.slane %v3099, %v3107
    %v3110 = vunpack.c.l.s4 1966171168
    %v3111 = vunpack.c.0.s8 %v3110
    %v3112 = vlaneseq
    %v3113 = vshrl.u32 %v3112, 7
    %v3114 = vsub.s32 %v3111, %v3113
    %v3115 = vrot.slane %v3101, %v3114
    %v3116 = vcombine.high %v3108, %v3108
    %v3117 = vcombine.high %v3115, %v3115
    %v3119 = vunpack.c.l.s4 1966171168
    %v3120 = vunpack.c.0.s8 %v3119
    %v3121 = vlaneseq
    %v3122 = vshrl.u32 %v3121, 7
    %v3123 = vsub.s32 %v3120, %v3122
    %v3124 = vrot.slane %v3108, %v3123
    %v3126 = vunpack.c.l.s4 1966171168
    %v3127 = vunpack.c.0.s8 %v3126
    %v3128 = vlaneseq
    %v3129 = vshrl.u32 %v3128, 7
    %v3130 = vsub.s32 %v3127, %v3129
    %v3131 = vrot.slane %v3115, %v3130
    %v3133 = vunpack.c.l.s4 1966171168
    %v3134 = vunpack.c.0.s8 %v3133
    %v3135 = vlaneseq
    %v3136 = vshrl.u32 %v3135, 7
    %v3137 = vsub.s32 %v3134, %v3136
    %v3138 = vrot.slane %v3116, %v3137
    %v3140 = vunpack.c.l.s4 1966171168
    %v3141 = vunpack.c.0.s8 %v3140
    %v3142 = vlaneseq
    %v3143 = vshrl.u32 %v3142, 7
    %v3144 = vsub.s32 %v3141, %v3143
    %v3145 = vrot.slane %v3117, %v3144
    %v3146 = vcombine.high %v3124, %v3124
    %v3147 = vcombine.high %v3131, %v3131
    %v3148 = vcombine.high %v3138, %v3138
    %v3149 = vcombine.high %v3145, %v3145
    %3158 = vst [vmem:[#allocation2] sm:$0x1] %v3124
    %3159 = vst [vmem:[#allocation2 + $0x1] sm:$0x1] %v3138
    %3160 = vst [vmem:[#allocation2 + $0x2] sm:$0x1] %v3146
    %3161 = vst [vmem:[#allocation2 + $0x3] sm:$0x1] %v3148
    %3162 = vst [vmem:[#allocation2 + $0x4] sm:$0x1] %v3131
    %3163 = vst [vmem:[#allocation2 + $0x5] sm:$0x1] %v3145
    %3164 = vst [vmem:[#allocation2 + $0x6] sm:$0x1] %v3147
    %3165 = vst [vmem:[#allocation2 + $0x7] sm:$0x1] %v3149
    // Predicated region
    $region30: #{mnist_forward.1} parent=1 // pred_check
      _
    $region31: #{mnist_forward.1} parent=1 // pred_check_branch
      %3167 = sbr.rel (0) target = $region33
    $region32: #{mnist_forward.1} parent=1 // pred_region
      // Predicated region
      $region34: #{mnist_forward.1} parent=32 // pred_check
        _
      $region35: #{mnist_forward.1} parent=32 // pred_check_branch
        %3169 = sbr.rel (0) target = $region37
      $region36: #{mnist_forward.1} parent=32 // pred_region
        // Predicated region
        $region38: #{mnist_forward.1} parent=36 // pred_check
          _
        $region39: #{mnist_forward.1} parent=36 // pred_check_branch
          %3171 = sbr.rel target = $region41
        $region40: #{mnist_forward.1} parent=36 // pred_region
          // Predicated region
          $region53: #{mnist_forward.1} parent=40 // pred_check
            _
          $region54: #{mnist_forward.1} parent=40 // pred_check_branch
            %3186 = sbr.rel (0) target = $region56
          $region55: #{mnist_forward.1} parent=40 // pred_region
            loop: start=0, step=1, limit=1
            $region57: #{mnist_forward.1} parent=55 // loop_pre_header
              _
            $region58: #{mnist_forward.1} parent=55 // loop_header
              %s3189 = sphi 0, %s3193
              %p3190 = scmp.ge.s32.totalorder %s3189, 1
              %s3194 = sphi [#allocation2], [#allocation2]
              %s3195 = sphi %s7, %s7
            $region59: #{mnist_forward.1} parent=55 // loop_header_branch
              %3192 = sbr.rel (%p3190) target = $region63
            $region60: #{mnist_forward.1} parent=55 // loop_body
              %v3196 = vld [vmem:[%s3194] sm:$0x1]
              %3197 = vst [vmem:[%s3195] sm:$0x1] %v3196
            $region61: #{mnist_forward.1} parent=55 // loop_footer
              %s3193 = sadd.s32 1, %s3189
            $region62: #{mnist_forward.1} parent=55 // loop_footer_branch
              %3188 = sbr.rel target = $region58
            $region63: #{mnist_forward.1} parent=55 // loop_exit
              _
          $region56: #{mnist_forward.1} parent=40 // pred_fallthru
            _
        $region41: #{mnist_forward.1} parent=36 // pred_fallthru
          _
        // Predicated region
        $region42: #{mnist_forward.1} parent=36 // pred_check
          _
        $region43: #{mnist_forward.1} parent=36 // pred_check_branch
          %3173 = sbr.rel (0) target = $region45
        $region44: #{mnist_forward.1} parent=36 // pred_region
          loop: start=0, step=1, limit=1
          $region46: #{mnist_forward.1} parent=44 // loop_pre_header
            _
          $region47: #{mnist_forward.1} parent=44 // loop_header
            %s3176 = sphi 0, %s3180
            %p3177 = scmp.ge.s32.totalorder %s3176, 1
            %s3181 = sphi [#allocation2], [#allocation2]
            %s3182 = sphi %s7, %s7
          $region48: #{mnist_forward.1} parent=44 // loop_header_branch
            %3179 = sbr.rel (%p3177) target = $region52
          $region49: #{mnist_forward.1} parent=44 // loop_body
            %v3183 = vld [vmem:[%s3181] sm:$0x1]
            %3184 = vst [vmem:[%s3182] sm:$0x1] %v3183
          $region50: #{mnist_forward.1} parent=44 // loop_footer
            %s3180 = sadd.s32 1, %s3176
          $region51: #{mnist_forward.1} parent=44 // loop_footer_branch
            %3175 = sbr.rel target = $region47
          $region52: #{mnist_forward.1} parent=44 // loop_exit
            _
        $region45: #{mnist_forward.1} parent=36 // pred_fallthru
          _
      $region37: #{mnist_forward.1} parent=32 // pred_fallthru
        _
      %3198 = vnop
    $region33: #{mnist_forward.1} parent=1 // pred_fallthru
      _
    // Predicated region
    $region64: #{mnist_forward.1} parent=1 // pred_check
      _
    $region65: #{mnist_forward.1} parent=1 // pred_check_branch
      %3200 = sbr.rel (0) target = $region67
    $region66: #{mnist_forward.1} parent=1 // pred_region
      _
    $region67: #{mnist_forward.1} parent=1 // pred_fallthru
      _

</llo_original>
